<compile_context>
chip_gen: v5e
topology: v5e:2x2
jax: 0.10.0
libtpu: 0.0.40
codegen_flags: <defaults>
</compile_context>

<pallas_src>
import jax
import jax.numpy as jnp
import numpy as np
from jax.experimental import pallas as pl
from jax.experimental.pallas import tpu as pltpu

# ---- model dims (match the PyTorch module) ----
N_NODES = 8            # nodes per graph
NUM_FEATURES = 16      # input feature dim
HEADS = 2              # attention heads
F1 = 32                # conv1 out channels per head
F2 = 16                # conv2 out channels per head
NEG_SLOPE = 0.2        # GATConv default leaky_relu slope
OUT_CLASSES = 2

# ---- batching / tiling ----
GRAPHS_PER_BLOCK = 16                      # 16 graphs * 8 nodes = 128 sublanes per step
GN = GRAPHS_PER_BLOCK * N_NODES            # 128
NUM_BLOCKS = 2                             # grid size; "parallel" -> both TCs on v7x
LANES = 128
NEG_BIG = -1e30                            # additive mask; exp() underflows to exactly 0

# ---- parameter-slab row layout (every tensor starts on an 8-row boundary) ----
R_W1 = 0                                   # [16, 64]
R_W2 = 16                                  # [64, 32]
R_FC1 = 80                                 # [32, 32]
R_FC2 = 112                                # [32, 128]  (fc2 weights padded to 128 lanes)
R_AS1 = 144                                # [2, 32]
R_AD1 = 152                                # [2, 32]
R_AS2 = 160                                # [2, 16]
R_AD2 = 168                                # [2, 16]
R_B1 = 176                                 # [1, 64]
R_B2 = 184                                 # [1, 32]
R_FCB = 192                                # [1, 32]
R_FC2B = 200                               # [1, 128]   (padded)
R_POOL = 208                               # [16, 128]  static global_add_pool matrix
P_ROWS = 224


def _gat_layer(x, adj_bias, w, att_src, att_dst, bias, heads, f_out):
    """One GATConv (concat=True) over a block of graphs with block-diagonal additive edge bias."""
    x_src = jnp.dot(x, w, preferred_element_type=jnp.float32)               # [GN, H*F]
    head_outs = []
    for h in range(heads):
        x_h = x_src[:, h * f_out:(h + 1) * f_out]                            # [GN, F]
        # destination score: VPU multiply + lane (XLU) reduction -> column vector
        a_dst = jnp.sum(x_h * att_dst[h:h + 1, :], axis=-1, keepdims=True)   # [GN, 1]
        # source score laid out along lanes via a q.kT-style contraction (one MXU push)
        a_src = jax.lax.dot_general(
            att_src[h:h + 1, :], x_h,
            dimension_numbers=(((1,), (1,)), ((), ())),
            preferred_element_type=jnp.float32)                              # [1, GN]
        e = a_dst + a_src                                  # e[i, j] = a_dst[i] + a_src[j]
        e = jnp.where(e > 0.0, e, NEG_SLOPE * e)           # leaky_relu
        e = e + adj_bias                                   # 0 on real/self edges, -1e30 otherwise
        e = e - jnp.max(e, axis=-1, keepdims=True)
        p = jnp.exp(e)                                     # masked entries underflow to exactly 0
        denom = jnp.sum(p, axis=-1, keepdims=True)         # >= 1 thanks to the self loop
        attn = p * pl.reciprocal(denom, approx=True)       # EUP path, effectively free
        head_outs.append(jnp.dot(attn, x_h, preferred_element_type=jnp.float32))
    return jnp.concatenate(head_outs, axis=-1) + bias      # concat heads + bias


def gat_classifier_kernel(x_ref, adjb_ref, p_ref, out_ref):
    x = x_ref[...]                                         # [GN, NUM_FEATURES]
    adj_bias = adjb_ref[0]                                 # [GN, GN] block-diag additive mask

    # Static views into the packed parameter slab (single resident DMA'd input).
    w1 = p_ref[R_W1:R_W1 + NUM_FEATURES, :HEADS * F1]
    w2 = p_ref[R_W2:R_W2 + HEADS * F1, :HEADS * F2]
    fc_w = p_ref[R_FC1:R_FC1 + HEADS * F2, :32]
    fc2_w = p_ref[R_FC2:R_FC2 + 32, :]                     # padded to 128 output lanes
    as1 = p_ref[R_AS1:R_AS1 + HEADS, :F1]
    ad1 = p_ref[R_AD1:R_AD1 + HEADS, :F1]
    as2 = p_ref[R_AS2:R_AS2 + HEADS, :F2]
    ad2 = p_ref[R_AD2:R_AD2 + HEADS, :F2]
    b1 = p_ref[R_B1:R_B1 + 1, :HEADS * F1]
    b2 = p_ref[R_B2:R_B2 + 1, :HEADS * F2]
    fc_b = p_ref[R_FCB:R_FCB + 1, :32]
    fc2_b = p_ref[R_FC2B:R_FC2B + 1, :]
    pool = p_ref[R_POOL:R_POOL + GRAPHS_PER_BLOCK, :]      # [G, GN] static pooling matrix

    h = _gat_layer(x, adj_bias, w1, as1, ad1, b1, HEADS, F1)   # conv1
    h = jnp.maximum(h, 0.0)                                    # relu
    h = _gat_layer(h, adj_bias, w2, as2, ad2, b2, HEADS, F2)   # conv2

    # global_add_pool per graph: one MXU push with the precomputed pooling matrix.
    pooled = jnp.dot(pool, h, preferred_element_type=jnp.float32)            # [G, H*F2]

    z = jnp.dot(pooled, fc_w, preferred_element_type=jnp.float32) + fc_b     # fc
    z = jnp.dot(z, fc2_w, preferred_element_type=jnp.float32) + fc2_b        # fc2 (128-lane dense)
    out_ref[...] = z


def gat_classifier_forward(x_all, adj_bias_blocks, params_slab):
    num_blocks = adj_bias_blocks.shape[0]
    out = pl.pallas_call(
        gat_classifier_kernel,
        out_shape=jax.ShapeDtypeStruct((num_blocks * GRAPHS_PER_BLOCK, LANES), jnp.float32),
        grid_spec=pltpu.PrefetchScalarGridSpec(
            num_scalar_prefetch=0,
            grid=(num_blocks,),
            in_specs=[
                pl.BlockSpec((GN, NUM_FEATURES), lambda i: (i, 0)),
                pl.BlockSpec((1, GN, GN), lambda i: (i, 0, 0)),
                pl.BlockSpec((P_ROWS, LANES), lambda i: (0, 0)),   # params resident across steps
            ],
            out_specs=pl.BlockSpec((GRAPHS_PER_BLOCK, LANES), lambda i: (i, 0)),
        ),
        compiler_params=pltpu.CompilerParams(
            dimension_semantics=("parallel",)),   # shards blocks across TCs on v7x
    )(x_all, adj_bias_blocks, params_slab)
    return out[:, :OUT_CLASSES]                   # drop lane padding -> [B, 2]


# ------------------------ parameter construction / packing ------------------------

def init_params(key):
    ks = jax.random.split(key, 10)

    def rnd(k, shape):
        return (0.1 * jax.random.normal(k, shape)).astype(jnp.float32)

    return dict(
        w1=rnd(ks[0], (NUM_FEATURES, HEADS * F1)),
        att_src1=rnd(ks[1], (HEADS, F1)),
        att_dst1=rnd(ks[2], (HEADS, F1)),
        b1=rnd(ks[3], (1, HEADS * F1)),
        w2=rnd(ks[4], (HEADS * F1, HEADS * F2)),
        att_src2=rnd(ks[5], (HEADS, F2)),
        att_dst2=rnd(ks[6], (HEADS, F2)),
        b2=rnd(ks[7], (1, HEADS * F2)),
        fc_w=rnd(ks[8], (HEADS * F2, 32)),
        fc_b=jnp.zeros((1, 32), jnp.float32),
        fc2_w=rnd(ks[9], (32, OUT_CLASSES)),
        fc2_b=jnp.zeros((1, OUT_CLASSES), jnp.float32),
    )


def build_pool_matrix():
    """Static [GRAPHS_PER_BLOCK, GN] global_add_pool matrix for one block of graphs."""
    pool = np.zeros((GRAPHS_PER_BLOCK, GN), np.float32)
    for g in range(GRAPHS_PER_BLOCK):
        pool[g, g * N_NODES:(g + 1) * N_NODES] = 1.0
    return pool


def pack_params(params):
    """Pack all weights/biases + pooling matrix into one lane-dense [P_ROWS, 128] f32 slab."""
    slab = np.zeros((P_ROWS, LANES), np.float32)
    slab[R_W1:R_W1 + NUM_FEATURES, :HEADS * F1] = np.asarray(params["w1"])
    slab[R_W2:R_W2 + HEADS * F1, :HEADS * F2] = np.asarray(params["w2"])
    slab[R_FC1:R_FC1 + HEADS * F2, :32] = np.asarray(params["fc_w"])
    slab[R_FC2:R_FC2 + 32, :OUT_CLASSES] = np.asarray(params["fc2_w"])
    slab[R_AS1:R_AS1 + HEADS, :F1] = np.asarray(params["att_src1"])
    slab[R_AD1:R_AD1 + HEADS, :F1] = np.asarray(params["att_dst1"])
    slab[R_AS2:R_AS2 + HEADS, :F2] = np.asarray(params["att_src2"])
    slab[R_AD2:R_AD2 + HEADS, :F2] = np.asarray(params["att_dst2"])
    slab[R_B1, :HEADS * F1] = np.asarray(params["b1"])[0]
    slab[R_B2, :HEADS * F2] = np.asarray(params["b2"])[0]
    slab[R_FCB, :32] = np.asarray(params["fc_b"])[0]
    slab[R_FC2B, :OUT_CLASSES] = np.asarray(params["fc2_b"])[0]
    slab[R_POOL:R_POOL + GRAPHS_PER_BLOCK, :] = build_pool_matrix()
    return jnp.asarray(slab)


# ------------------------ graph / adjacency construction ------------------------

def build_dense_adj(edge_index, n):
    """adj[dst, src] = 1 for each edge (src -> dst), plus self loops (PyG add_self_loops)."""
    adj = np.zeros((n, n), np.float32)
    ei = np.asarray(edge_index)
    adj[ei[1], ei[0]] = 1.0
    adj = np.maximum(adj, np.eye(n, dtype=np.float32))
    return adj


def build_block_adj_bias(per_graph_adj):
    """per_graph_adj: [B, N, N] -> block-diag additive softmax bias [NUM_BLOCKS, GN, GN].

    0.0 where an edge (incl. self loop) exists, -1e30 elsewhere.
    """
    b = per_graph_adj.shape[0]
    assert b == NUM_BLOCKS * GRAPHS_PER_BLOCK
    out = np.full((NUM_BLOCKS, GN, GN), NEG_BIG, np.float32)
    for blk in range(NUM_BLOCKS):
        for g in range(GRAPHS_PER_BLOCK):
            gi = blk * GRAPHS_PER_BLOCK + g
            sl = slice(g * N_NODES, (g + 1) * N_NODES)
            out[blk, sl, sl] = np.where(per_graph_adj[gi] > 0.0, 0.0, NEG_BIG)
    return jnp.asarray(out)


# ------------------------ pure-JAX reference (independent of kernel layout) ------------------------

def reference_forward_single(x, adj, params):
    mask = adj > 0.0

    def layer(xin, w, att_src, att_dst, bias, f_out):
        x_src = xin @ w
        outs = []
        for h in range(HEADS):
            x_h = x_src[:, h * f_out:(h + 1) * f_out]
            a_src = jnp.sum(x_h * att_src[h], axis=-1)
            a_dst = jnp.sum(x_h * att_dst[h], axis=-1)
            e = a_dst[:, None] + a_src[None, :]
            e = jnp.where(e > 0.0, e, NEG_SLOPE * e)
            e = jnp.where(mask, e, -jnp.inf)
            attn = jax.nn.softmax(e, axis=-1)
            outs.append(attn @ x_h)
        return jnp.concatenate(outs, axis=-1) + bias

    h = layer(x, params["w1"], params["att_src1"], params["att_dst1"], params["b1"], F1)
    h = jnp.maximum(h, 0.0)
    h = layer(h, params["w2"], params["att_src2"], params["att_dst2"], params["b2"], F2)
    pooled = jnp.sum(h, axis=0, keepdims=True)              # global_add_pool (single graph)
    z = pooled @ params["fc_w"] + params["fc_b"]
    z = z @ params["fc2_w"] + params["fc2_b"]
    return z


if __name__ == "__main__":
    key = jax.random.PRNGKey(0)
    k_x, k_p = jax.random.split(key)

    n_graphs = NUM_BLOCKS * GRAPHS_PER_BLOCK                 # 32 graphs, 8 nodes each
    x_all = jax.random.normal(k_x, (n_graphs * N_NODES, NUM_FEATURES), dtype=jnp.float32)

    # small directed topology (ring + shortcuts), shared by every graph in the batch
    edge_index = np.array(
        [[0, 1, 2, 3, 4, 5, 6, 7, 0, 2, 5, 7],
         [1, 2, 3, 4, 5, 6, 7, 0, 4, 6, 1, 3]], dtype=np.int32)

    params = init_params(k_p)
    params_slab = pack_params(params)

    adj_single = build_dense_adj(edge_index, N_NODES)        # [N, N] with self loops
    per_graph_adj = np.broadcast_to(adj_single, (n_graphs, N_NODES, N_NODES))
    adj_bias_blocks = build_block_adj_bias(per_graph_adj)     # [NUM_BLOCKS, GN, GN]

    out = gat_classifier_forward(x_all, adj_bias_blocks, params_slab)
    out = jax.block_until_ready(out)

    adj_j = jnp.asarray(adj_single)
    refs = [reference_forward_single(x_all[g * N_NODES:(g + 1) * N_NODES], adj_j, params)
            for g in range(n_graphs)]
    ref = jnp.concatenate(refs, axis=0)

    assert out.shape == (n_graphs, OUT_CLASSES)
    assert np.all(np.isfinite(np.asarray(out)))
    assert np.allclose(np.asarray(out), np.asarray(ref), rtol=2e-3, atol=2e-3), (
        float(np.max(np.abs(np.asarray(out) - np.asarray(ref)))))

    print("KERNEL_OK")
</pallas_src>

<mosaic_0001>
module attributes {stable_mosaic.version = 11 : i64} {
  func.func @gat_classifier_kernel(%arg0: i32, %arg1: memref<128x16xf32, #tpu.memory_space<vmem>>, %arg2: memref<1x128x128xf32, #tpu.memory_space<vmem>>, %arg3: memref<224x128xf32, #tpu.memory_space<vmem>>, %arg4: memref<16x128xf32, #tpu.memory_space<vmem>>) attributes {dimension_semantics = [#tpu.dimension_semantics<parallel>], iteration_bounds = array<i64: 2>, scalar_prefetch = 0 : i64, scratch_operands = 0 : i64, tpu.core_type = #tpu.core_type<tc>, window_params = [{transform_indices = @transform_0, window_bounds = array<i64: 128, 16>}, {transform_indices = @transform_1, window_bounds = array<i64: 1, 128, 128>}, {pipeline_mode = #tpu.pipeline_mode<synchronous>, transform_indices = @transform_2, window_bounds = array<i64: 224, 128>}, {transform_indices = @transform_3, window_bounds = array<i64: 16, 128>}]} {
    %c0 = arith.constant 0 : index
    %c0_0 = arith.constant 0 : index
    %0 = vector.load %arg1[%c0, %c0_0] : memref<128x16xf32, #tpu.memory_space<vmem>>, vector<128x16xf32>
    %c0_1 = arith.constant 0 : index
    %c0_2 = arith.constant 0 : index
    %c0_3 = arith.constant 0 : index
    %1 = vector.load %arg2[%c0_1, %c0_2, %c0_3] : memref<1x128x128xf32, #tpu.memory_space<vmem>>, vector<1x128x128xf32>
    %2 = vector.shape_cast %1 : vector<1x128x128xf32> to vector<128x128xf32>
    %c0_4 = arith.constant 0 : index
    %c0_5 = arith.constant 0 : index
    %3 = vector.load %arg3[%c0_4, %c0_5] : memref<224x128xf32, #tpu.memory_space<vmem>>, vector<16x64xf32>
    %c16 = arith.constant 16 : index
    %c0_6 = arith.constant 0 : index
    %4 = vector.load %arg3[%c16, %c0_6] : memref<224x128xf32, #tpu.memory_space<vmem>>, vector<64x32xf32>
    %c80 = arith.constant 80 : index
    %c0_7 = arith.constant 0 : index
    %5 = vector.load %arg3[%c80, %c0_7] : memref<224x128xf32, #tpu.memory_space<vmem>>, vector<32x32xf32>
    %c112 = arith.constant 112 : index
    %c0_8 = arith.constant 0 : index
    %6 = vector.load %arg3[%c112, %c0_8] : memref<224x128xf32, #tpu.memory_space<vmem>>, vector<32x128xf32>
    %c144 = arith.constant 144 : index
    %c0_9 = arith.constant 0 : index
    %7 = vector.load %arg3[%c144, %c0_9] : memref<224x128xf32, #tpu.memory_space<vmem>>, vector<2x32xf32>
    %c152 = arith.constant 152 : index
    %c0_10 = arith.constant 0 : index
    %8 = vector.load %arg3[%c152, %c0_10] : memref<224x128xf32, #tpu.memory_space<vmem>>, vector<2x32xf32>
    %c160 = arith.constant 160 : index
    %c0_11 = arith.constant 0 : index
    %9 = vector.load %arg3[%c160, %c0_11] : memref<224x128xf32, #tpu.memory_space<vmem>>, vector<2x16xf32>
    %c168 = arith.constant 168 : index
    %c0_12 = arith.constant 0 : index
    %10 = vector.load %arg3[%c168, %c0_12] : memref<224x128xf32, #tpu.memory_space<vmem>>, vector<2x16xf32>
    %c176 = arith.constant 176 : index
    %c0_13 = arith.constant 0 : index
    %11 = vector.load %arg3[%c176, %c0_13] : memref<224x128xf32, #tpu.memory_space<vmem>>, vector<1x64xf32>
    %c184 = arith.constant 184 : index
    %c0_14 = arith.constant 0 : index
    %12 = vector.load %arg3[%c184, %c0_14] : memref<224x128xf32, #tpu.memory_space<vmem>>, vector<1x32xf32>
    %c192 = arith.constant 192 : index
    %c0_15 = arith.constant 0 : index
    %13 = vector.load %arg3[%c192, %c0_15] : memref<224x128xf32, #tpu.memory_space<vmem>>, vector<1x32xf32>
    %c200 = arith.constant 200 : index
    %c0_16 = arith.constant 0 : index
    %14 = vector.load %arg3[%c200, %c0_16] : memref<224x128xf32, #tpu.memory_space<vmem>>, vector<1x128xf32>
    %c208 = arith.constant 208 : index
    %c0_17 = arith.constant 0 : index
    %15 = vector.load %arg3[%c208, %c0_17] : memref<224x128xf32, #tpu.memory_space<vmem>>, vector<16x128xf32>
    %cst = arith.constant dense<0.000000e+00> : vector<128x64xf32>
    %16 = tpu.matmul %0, %3, %cst {dimension_numbers = #tpu.dot_dimension_numbers<[1], [0], [0], [1], [0, 0, 1, 1], [], []>} : vector<128x16xf32>, vector<16x64xf32>, vector<128x64xf32> -> vector<128x64xf32>
    %17 = vector.extract_strided_slice %16 {offsets = [0, 0], sizes = [128, 32], strides = [1, 1]} : vector<128x64xf32> to vector<128x32xf32>
    %18 = vector.extract_strided_slice %8 {offsets = [0, 0], sizes = [1, 32], strides = [1, 1]} : vector<2x32xf32> to vector<1x32xf32>
    %19 = vector.broadcast %18 : vector<1x32xf32> to vector<128x32xf32>
    %20 = arith.mulf %17, %19 : vector<128x32xf32>
    %cst_18 = arith.constant dense<0.000000e+00> : vector<128xf32>
    %21 = vector.multi_reduction <add>, %20, %cst_18 [1] : vector<128x32xf32> to vector<128xf32>
    %22 = vector.shape_cast %21 : vector<128xf32> to vector<128x1xf32>
    %23 = vector.extract_strided_slice %7 {offsets = [0, 0], sizes = [1, 32], strides = [1, 1]} : vector<2x32xf32> to vector<1x32xf32>
    %cst_19 = arith.constant dense<0.000000e+00> : vector<1x128xf32>
    %24 = tpu.matmul %23, %17, %cst_19 {dimension_numbers = #tpu.dot_dimension_numbers<[1], [1], [0], [0], [0, 0, 1, 0], [], []>} : vector<1x32xf32>, vector<128x32xf32>, vector<1x128xf32> -> vector<1x128xf32>
    %25 = vector.broadcast %22 : vector<128x1xf32> to vector<128x128xf32>
    %26 = vector.broadcast %24 : vector<1x128xf32> to vector<128x128xf32>
    %27 = arith.addf %25, %26 : vector<128x128xf32>
    %cst_20 = arith.constant 0.000000e+00 : f32
    %28 = vector.broadcast %cst_20 : f32 to vector<128x128xf32>
    %29 = arith.cmpf ogt, %27, %28 : vector<128x128xf32>
    %cst_21 = arith.constant 2.000000e-01 : f32
    %30 = vector.broadcast %cst_21 : f32 to vector<128x128xf32>
    %31 = arith.mulf %30, %27 : vector<128x128xf32>
    %32 = arith.select %29, %27, %31 : vector<128x128xi1>, vector<128x128xf32>
    %33 = arith.addf %32, %2 : vector<128x128xf32>
    %cst_22 = arith.constant dense<0xFF800000> : vector<128xf32>
    %34 = vector.multi_reduction <maximumf>, %33, %cst_22 [1] : vector<128x128xf32> to vector<128xf32>
    %35 = vector.shape_cast %34 : vector<128xf32> to vector<128x1xf32>
    %36 = vector.broadcast %35 : vector<128x1xf32> to vector<128x128xf32>
    %37 = arith.subf %33, %36 : vector<128x128xf32>
    %38 = math.exp %37 : vector<128x128xf32>
    %cst_23 = arith.constant dense<0.000000e+00> : vector<128xf32>
    %39 = vector.multi_reduction <add>, %38, %cst_23 [1] : vector<128x128xf32> to vector<128xf32>
    %40 = vector.shape_cast %39 : vector<128xf32> to vector<128x1xf32>
    %41 = tpu.reciprocal %40 {approx = true} : vector<128x1xf32> -> vector<128x1xf32>
    %42 = vector.broadcast %41 : vector<128x1xf32> to vector<128x128xf32>
    %43 = arith.mulf %38, %42 : vector<128x128xf32>
    %cst_24 = arith.constant dense<0.000000e+00> : vector<128x32xf32>
    %44 = tpu.matmul %43, %17, %cst_24 {dimension_numbers = #tpu.dot_dimension_numbers<[1], [0], [0], [1], [0, 0, 1, 1], [], []>} : vector<128x128xf32>, vector<128x32xf32>, vector<128x32xf32> -> vector<128x32xf32>
    %45 = vector.extract_strided_slice %16 {offsets = [0, 32], sizes = [128, 32], strides = [1, 1]} : vector<128x64xf32> to vector<128x32xf32>
    %46 = vector.extract_strided_slice %8 {offsets = [1, 0], sizes = [1, 32], strides = [1, 1]} : vector<2x32xf32> to vector<1x32xf32>
    %47 = vector.broadcast %46 : vector<1x32xf32> to vector<128x32xf32>
    %48 = arith.mulf %45, %47 : vector<128x32xf32>
    %cst_25 = arith.constant dense<0.000000e+00> : vector<128xf32>
    %49 = vector.multi_reduction <add>, %48, %cst_25 [1] : vector<128x32xf32> to vector<128xf32>
    %50 = vector.shape_cast %49 : vector<128xf32> to vector<128x1xf32>
    %51 = vector.extract_strided_slice %7 {offsets = [1, 0], sizes = [1, 32], strides = [1, 1]} : vector<2x32xf32> to vector<1x32xf32>
    %cst_26 = arith.constant dense<0.000000e+00> : vector<1x128xf32>
    %52 = tpu.matmul %51, %45, %cst_26 {dimension_numbers = #tpu.dot_dimension_numbers<[1], [1], [0], [0], [0, 0, 1, 0], [], []>} : vector<1x32xf32>, vector<128x32xf32>, vector<1x128xf32> -> vector<1x128xf32>
    %53 = vector.broadcast %50 : vector<128x1xf32> to vector<128x128xf32>
    %54 = vector.broadcast %52 : vector<1x128xf32> to vector<128x128xf32>
    %55 = arith.addf %53, %54 : vector<128x128xf32>
    %cst_27 = arith.constant 0.000000e+00 : f32
    %56 = vector.broadcast %cst_27 : f32 to vector<128x128xf32>
    %57 = arith.cmpf ogt, %55, %56 : vector<128x128xf32>
    %cst_28 = arith.constant 2.000000e-01 : f32
    %58 = vector.broadcast %cst_28 : f32 to vector<128x128xf32>
    %59 = arith.mulf %58, %55 : vector<128x128xf32>
    %60 = arith.select %57, %55, %59 : vector<128x128xi1>, vector<128x128xf32>
    %61 = arith.addf %60, %2 : vector<128x128xf32>
    %cst_29 = arith.constant dense<0xFF800000> : vector<128xf32>
    %62 = vector.multi_reduction <maximumf>, %61, %cst_29 [1] : vector<128x128xf32> to vector<128xf32>
    %63 = vector.shape_cast %62 : vector<128xf32> to vector<128x1xf32>
    %64 = vector.broadcast %63 : vector<128x1xf32> to vector<128x128xf32>
    %65 = arith.subf %61, %64 : vector<128x128xf32>
    %66 = math.exp %65 : vector<128x128xf32>
    %cst_30 = arith.constant dense<0.000000e+00> : vector<128xf32>
    %67 = vector.multi_reduction <add>, %66, %cst_30 [1] : vector<128x128xf32> to vector<128xf32>
    %68 = vector.shape_cast %67 : vector<128xf32> to vector<128x1xf32>
    %69 = tpu.reciprocal %68 {approx = true} : vector<128x1xf32> -> vector<128x1xf32>
    %70 = vector.broadcast %69 : vector<128x1xf32> to vector<128x128xf32>
    %71 = arith.mulf %66, %70 : vector<128x128xf32>
    %cst_31 = arith.constant dense<0.000000e+00> : vector<128x32xf32>
    %72 = tpu.matmul %71, %45, %cst_31 {dimension_numbers = #tpu.dot_dimension_numbers<[1], [0], [0], [1], [0, 0, 1, 1], [], []>} : vector<128x128xf32>, vector<128x32xf32>, vector<128x32xf32> -> vector<128x32xf32>
    %73 = tpu.concatenate %44, %72 in 1 : vector<128x32xf32>, vector<128x32xf32> -> vector<128x64xf32>
    %74 = vector.broadcast %11 : vector<1x64xf32> to vector<128x64xf32>
    %75 = arith.addf %73, %74 : vector<128x64xf32>
    %cst_32 = arith.constant 0.000000e+00 : f32
    %76 = vector.broadcast %cst_32 : f32 to vector<128x64xf32>
    %77 = arith.maximumf %75, %76 : vector<128x64xf32>
    %cst_33 = arith.constant dense<0.000000e+00> : vector<128x32xf32>
    %78 = tpu.matmul %77, %4, %cst_33 {dimension_numbers = #tpu.dot_dimension_numbers<[1], [0], [0], [1], [0, 0, 1, 1], [], []>} : vector<128x64xf32>, vector<64x32xf32>, vector<128x32xf32> -> vector<128x32xf32>
    %79 = vector.extract_strided_slice %78 {offsets = [0, 0], sizes = [128, 16], strides = [1, 1]} : vector<128x32xf32> to vector<128x16xf32>
    %80 = vector.extract_strided_slice %10 {offsets = [0, 0], sizes = [1, 16], strides = [1, 1]} : vector<2x16xf32> to vector<1x16xf32>
    %81 = vector.broadcast %80 : vector<1x16xf32> to vector<128x16xf32>
    %82 = arith.mulf %79, %81 : vector<128x16xf32>
    %cst_34 = arith.constant dense<0.000000e+00> : vector<128xf32>
    %83 = vector.multi_reduction <add>, %82, %cst_34 [1] : vector<128x16xf32> to vector<128xf32>
    %84 = vector.shape_cast %83 : vector<128xf32> to vector<128x1xf32>
    %85 = vector.extract_strided_slice %9 {offsets = [0, 0], sizes = [1, 16], strides = [1, 1]} : vector<2x16xf32> to vector<1x16xf32>
    %cst_35 = arith.constant dense<0.000000e+00> : vector<1x128xf32>
    %86 = tpu.matmul %85, %79, %cst_35 {dimension_numbers = #tpu.dot_dimension_numbers<[1], [1], [0], [0], [0, 0, 1, 0], [], []>} : vector<1x16xf32>, vector<128x16xf32>, vector<1x128xf32> -> vector<1x128xf32>
    %87 = vector.broadcast %84 : vector<128x1xf32> to vector<128x128xf32>
    %88 = vector.broadcast %86 : vector<1x128xf32> to vector<128x128xf32>
    %89 = arith.addf %87, %88 : vector<128x128xf32>
    %cst_36 = arith.constant 0.000000e+00 : f32
    %90 = vector.broadcast %cst_36 : f32 to vector<128x128xf32>
    %91 = arith.cmpf ogt, %89, %90 : vector<128x128xf32>
    %cst_37 = arith.constant 2.000000e-01 : f32
    %92 = vector.broadcast %cst_37 : f32 to vector<128x128xf32>
    %93 = arith.mulf %92, %89 : vector<128x128xf32>
    %94 = arith.select %91, %89, %93 : vector<128x128xi1>, vector<128x128xf32>
    %95 = arith.addf %94, %2 : vector<128x128xf32>
    %cst_38 = arith.constant dense<0xFF800000> : vector<128xf32>
    %96 = vector.multi_reduction <maximumf>, %95, %cst_38 [1] : vector<128x128xf32> to vector<128xf32>
    %97 = vector.shape_cast %96 : vector<128xf32> to vector<128x1xf32>
    %98 = vector.broadcast %97 : vector<128x1xf32> to vector<128x128xf32>
    %99 = arith.subf %95, %98 : vector<128x128xf32>
    %100 = math.exp %99 : vector<128x128xf32>
    %cst_39 = arith.constant dense<0.000000e+00> : vector<128xf32>
    %101 = vector.multi_reduction <add>, %100, %cst_39 [1] : vector<128x128xf32> to vector<128xf32>
    %102 = vector.shape_cast %101 : vector<128xf32> to vector<128x1xf32>
    %103 = tpu.reciprocal %102 {approx = true} : vector<128x1xf32> -> vector<128x1xf32>
    %104 = vector.broadcast %103 : vector<128x1xf32> to vector<128x128xf32>
    %105 = arith.mulf %100, %104 : vector<128x128xf32>
    %cst_40 = arith.constant dense<0.000000e+00> : vector<128x16xf32>
    %106 = tpu.matmul %105, %79, %cst_40 {dimension_numbers = #tpu.dot_dimension_numbers<[1], [0], [0], [1], [0, 0, 1, 1], [], []>} : vector<128x128xf32>, vector<128x16xf32>, vector<128x16xf32> -> vector<128x16xf32>
    %107 = vector.extract_strided_slice %78 {offsets = [0, 16], sizes = [128, 16], strides = [1, 1]} : vector<128x32xf32> to vector<128x16xf32>
    %108 = vector.extract_strided_slice %10 {offsets = [1, 0], sizes = [1, 16], strides = [1, 1]} : vector<2x16xf32> to vector<1x16xf32>
    %109 = vector.broadcast %108 : vector<1x16xf32> to vector<128x16xf32>
    %110 = arith.mulf %107, %109 : vector<128x16xf32>
    %cst_41 = arith.constant dense<0.000000e+00> : vector<128xf32>
    %111 = vector.multi_reduction <add>, %110, %cst_41 [1] : vector<128x16xf32> to vector<128xf32>
    %112 = vector.shape_cast %111 : vector<128xf32> to vector<128x1xf32>
    %113 = vector.extract_strided_slice %9 {offsets = [1, 0], sizes = [1, 16], strides = [1, 1]} : vector<2x16xf32> to vector<1x16xf32>
    %cst_42 = arith.constant dense<0.000000e+00> : vector<1x128xf32>
    %114 = tpu.matmul %113, %107, %cst_42 {dimension_numbers = #tpu.dot_dimension_numbers<[1], [1], [0], [0], [0, 0, 1, 0], [], []>} : vector<1x16xf32>, vector<128x16xf32>, vector<1x128xf32> -> vector<1x128xf32>
    %115 = vector.broadcast %112 : vector<128x1xf32> to vector<128x128xf32>
    %116 = vector.broadcast %114 : vector<1x128xf32> to vector<128x128xf32>
    %117 = arith.addf %115, %116 : vector<128x128xf32>
    %cst_43 = arith.constant 0.000000e+00 : f32
    %118 = vector.broadcast %cst_43 : f32 to vector<128x128xf32>
    %119 = arith.cmpf ogt, %117, %118 : vector<128x128xf32>
    %cst_44 = arith.constant 2.000000e-01 : f32
    %120 = vector.broadcast %cst_44 : f32 to vector<128x128xf32>
    %121 = arith.mulf %120, %117 : vector<128x128xf32>
    %122 = arith.select %119, %117, %121 : vector<128x128xi1>, vector<128x128xf32>
    %123 = arith.addf %122, %2 : vector<128x128xf32>
    %cst_45 = arith.constant dense<0xFF800000> : vector<128xf32>
    %124 = vector.multi_reduction <maximumf>, %123, %cst_45 [1] : vector<128x128xf32> to vector<128xf32>
    %125 = vector.shape_cast %124 : vector<128xf32> to vector<128x1xf32>
    %126 = vector.broadcast %125 : vector<128x1xf32> to vector<128x128xf32>
    %127 = arith.subf %123, %126 : vector<128x128xf32>
    %128 = math.exp %127 : vector<128x128xf32>
    %cst_46 = arith.constant dense<0.000000e+00> : vector<128xf32>
    %129 = vector.multi_reduction <add>, %128, %cst_46 [1] : vector<128x128xf32> to vector<128xf32>
    %130 = vector.shape_cast %129 : vector<128xf32> to vector<128x1xf32>
    %131 = tpu.reciprocal %130 {approx = true} : vector<128x1xf32> -> vector<128x1xf32>
    %132 = vector.broadcast %131 : vector<128x1xf32> to vector<128x128xf32>
    %133 = arith.mulf %128, %132 : vector<128x128xf32>
    %cst_47 = arith.constant dense<0.000000e+00> : vector<128x16xf32>
    %134 = tpu.matmul %133, %107, %cst_47 {dimension_numbers = #tpu.dot_dimension_numbers<[1], [0], [0], [1], [0, 0, 1, 1], [], []>} : vector<128x128xf32>, vector<128x16xf32>, vector<128x16xf32> -> vector<128x16xf32>
    %135 = tpu.concatenate %106, %134 in 1 : vector<128x16xf32>, vector<128x16xf32> -> vector<128x32xf32>
    %136 = vector.broadcast %12 : vector<1x32xf32> to vector<128x32xf32>
    %137 = arith.addf %135, %136 : vector<128x32xf32>
    %cst_48 = arith.constant dense<0.000000e+00> : vector<16x32xf32>
    %138 = tpu.matmul %15, %137, %cst_48 {dimension_numbers = #tpu.dot_dimension_numbers<[1], [0], [0], [1], [0, 0, 1, 1], [], []>} : vector<16x128xf32>, vector<128x32xf32>, vector<16x32xf32> -> vector<16x32xf32>
    %cst_49 = arith.constant dense<0.000000e+00> : vector<16x32xf32>
    %139 = tpu.matmul %138, %5, %cst_49 {dimension_numbers = #tpu.dot_dimension_numbers<[1], [0], [0], [1], [0, 0, 1, 1], [], []>} : vector<16x32xf32>, vector<32x32xf32>, vector<16x32xf32> -> vector<16x32xf32>
    %140 = vector.broadcast %13 : vector<1x32xf32> to vector<16x32xf32>
    %141 = arith.addf %139, %140 : vector<16x32xf32>
    %cst_50 = arith.constant dense<0.000000e+00> : vector<16x128xf32>
    %142 = tpu.matmul %141, %6, %cst_50 {dimension_numbers = #tpu.dot_dimension_numbers<[1], [0], [0], [1], [0, 0, 1, 1], [], []>} : vector<16x32xf32>, vector<32x128xf32>, vector<16x128xf32> -> vector<16x128xf32>
    %143 = vector.broadcast %14 : vector<1x128xf32> to vector<16x128xf32>
    %144 = arith.addf %142, %143 : vector<16x128xf32>
    %c0_51 = arith.constant 0 : index
    %c0_52 = arith.constant 0 : index
    %145 = vector.load %arg4[%c0_51, %c0_52] : memref<16x128xf32, #tpu.memory_space<vmem>>, vector<16x128xf32>
    tpu.vector_store %arg4[%c0_51, %c0_52], %144 {strides = array<i32>} : memref<16x128xf32, #tpu.memory_space<vmem>>, vector<16x128xf32>,
    return
  }
  func.func @transform_0(%arg0: i32) -> (i32, i32) {
    %c0_i32 = arith.constant 0 : i32
    %c0_i32_0 = arith.constant 0 : i32
    return %arg0, %c0_i32 : i32, i32
  }
  func.func @transform_1(%arg0: i32) -> (i32, i32, i32) {
    %c0_i32 = arith.constant 0 : i32
    %c0_i32_0 = arith.constant 0 : i32
    %c0_i32_1 = arith.constant 0 : i32
    return %arg0, %c0_i32, %c0_i32_0 : i32, i32, i32
  }
  func.func @transform_2(%arg0: i32) -> (i32, i32) {
    %c0_i32 = arith.constant 0 : i32
    %c0_i32_0 = arith.constant 0 : i32
    %c0_i32_1 = arith.constant 0 : i32
    return %c0_i32, %c0_i32_0 : i32, i32
  }
  func.func @transform_3(%arg0: i32) -> (i32, i32) {
    %c0_i32 = arith.constant 0 : i32
    %c0_i32_0 = arith.constant 0 : i32
    return %arg0, %c0_i32 : i32, i32
  }
}

</mosaic_0001>

<llo_original>
// kernel: tpu_custom_call.1
$region0: #{tpu_custom_call.1}
  #allocation0 [shape = 'u32[]', space=smem, size = 0x4, offset = 0x4, fixed_abs, tag = 'smem constant byte address 0x4 - core index']
  #allocation1 [shape = 'u32[72,128]{1,0:T(1,128)}', space=vmem, size = 0x9000, scoped, tag = 'internal scratch']
  %s0 = inlined_call_operand.vmem [shape: f32[256,16], index: 0, kind: input, shape index: {}]
  %s1 = inlined_call_operand.vmem [shape: f32[2,128,128], index: 1, kind: input, shape index: {}]
  %s2 = inlined_call_operand.hbm [shape: f32[224,128], index: 2, kind: input, shape index: {}]
  %s3 = inlined_call_operand.hbm [shape: f32[32,128], index: 3, kind: output, shape index: {}]
  %s4 = sld [smem:[#allocation0]]
  $region49: #{tpu_custom_call.1} parent=0
    _
  %s6 = ssub.s32 1, %s4
  %s7 = scalar_select 0, %s6, %s4
  $region1: #{tpu_custom_call.1} parent=0
    #allocation2 [shape = 'u8[114688]{0}', space=vmem, size = 0x1c000, scoped, tag = 'input window, operand 2, single buffered']
    #allocation3 [shape = 's32[2]{0}', space=sflag, size = 0x8, scoped, tag = 'scoped memory for tpu_custom_call.1']
    #allocation4 [shape = 's32[2]{0}', space=sflag, size = 0x8, scoped, tag = 'scoped memory for tpu_custom_call.1']
    #allocation5 [shape = 'u8[16384]{0}', space=vmem, size = 0x4000, scoped, tag = 'output window, operand 0']
    %8 = vsyncpa [#allocation3], 0
    %9 = vsyncpa [#allocation4], 0
    %s10 = scalar_lea.sflag [#allocation4], 1
    %11 = vsyncpa %s10, 0
    loop: start=0, step=1, limit=4
    $region2: #{tpu_custom_call.1} parent=1 // loop_pre_header
      _
    $region3: #{tpu_custom_call.1} parent=1 // loop_header
      %s13 = sphi 0, %s17
      %p14 = scmp.ge.s32.totalorder %s13, 4
      %s23 = sphi 0, %s25
      %s26 = sphi 0, %s23
      %s27 = sphi 0, %s26
      %s43 = sphi 0, %s27
      %s49 = sphi 0, %s51
      %s52 = sphi 0, %s49
      %s53 = sphi 0, %s52
      %s69 = sphi 0, %s53
      %s73 = sphi 0, %s73
      %s75 = sphi 0, %s73
      %s76 = sphi 0, %s75
      %s90 = sphi 0, %s76
      %s96 = sphi 0, %s98
      %s99 = sphi 0, %s96
      %s100 = sphi 0, %s99
      %s116 = sphi 0, %s100
    $region4: #{tpu_custom_call.1} parent=1 // loop_header_branch
      %16 = sbr.rel (%p14) target = $region8
    $region5: #{tpu_custom_call.1} parent=1 // loop_body
      %s18 = ssub.s32 %s13, 1
      %s19 = ssub.s32 %s13, 2
      %s20 = sadd.s32 %s13, 1
      %s21 = ssub.s32 %s13, %s20
      %p22 = scmp.eq.s32.totalorder %s21, 0
      %s24 = sadd.s32 %s23, 1
      %s25 = scalar_select %p22, %s23, %s24
      %p28 = pneg %p22
      %p29 = scmp.eq.s32.totalorder %s13, 1
      %p30 = por %p28, %p29
      %p31 = scmp.ne.s32.totalorder %s23, %s26
      %p32 = scmp.eq.s32.totalorder %s13, 0
      %p33 = por %p31, %p32
      %p34 = scmp.ne.s32.totalorder %s23, %s26
      %p35 = scmp.eq.s32.totalorder %s18, 1
      %p36 = por %p34, %p35
      %p37 = scmp.ne.s32.totalorder %s26, %s27
      %p38 = scmp.eq.s32.totalorder %s18, 0
      %p39 = por %p37, %p38
      %p40 = scmp.ne.s32.totalorder %s26, %s27
      %p41 = scmp.eq.s32.totalorder %s19, 1
      %p42 = por %p40, %p41
      %p44 = scmp.ne.s32.totalorder %s27, %s43
      %p45 = scmp.eq.s32.totalorder %s19, 0
      %p46 = por %p44, %p45
      %s47 = ssub.s32 %s13, %s20
      %p48 = scmp.eq.s32.totalorder %s47, 0
      %s50 = sadd.s32 %s49, 1
      %s51 = scalar_select %p48, %s49, %s50
      %p54 = pneg %p48
      %p55 = scmp.eq.s32.totalorder %s13, 1
      %p56 = por %p54, %p55
      %p57 = scmp.ne.s32.totalorder %s49, %s52
      %p58 = scmp.eq.s32.totalorder %s13, 0
      %p59 = por %p57, %p58
      %p60 = scmp.ne.s32.totalorder %s49, %s52
      %p61 = scmp.eq.s32.totalorder %s18, 1
      %p62 = por %p60, %p61
      %p63 = scmp.ne.s32.totalorder %s52, %s53
      %p64 = scmp.eq.s32.totalorder %s18, 0
      %p65 = por %p63, %p64
      %p66 = scmp.ne.s32.totalorder %s52, %s53
      %p67 = scmp.eq.s32.totalorder %s19, 1
      %p68 = por %p66, %p67
      %p70 = scmp.ne.s32.totalorder %s53, %s69
      %p71 = scmp.eq.s32.totalorder %s19, 0
      %p72 = por %p70, %p71
      %s74 = sadd.s32 %s73, 1
      %p77 = scmp.eq.s32.totalorder %s13, 1
      %p78 = scmp.ne.s32.totalorder %s73, %s75
      %p79 = scmp.eq.s32.totalorder %s13, 0
      %p80 = por %p78, %p79
      %p81 = scmp.ne.s32.totalorder %s73, %s75
      %p82 = scmp.eq.s32.totalorder %s18, 1
      %p83 = por %p81, %p82
      %p84 = scmp.ne.s32.totalorder %s75, %s76
      %p85 = scmp.eq.s32.totalorder %s18, 0
      %p86 = por %p84, %p85
      %p87 = scmp.ne.s32.totalorder %s75, %s76
      %p88 = scmp.eq.s32.totalorder %s19, 1
      %p89 = por %p87, %p88
      %p91 = scmp.ne.s32.totalorder %s76, %s90
      %p92 = scmp.eq.s32.totalorder %s19, 0
      %p93 = por %p91, %p92
      %s94 = ssub.s32 %s13, %s20
      %p95 = scmp.eq.s32.totalorder %s94, 0
      %s97 = sadd.s32 %s96, 1
      %s98 = scalar_select %p95, %s96, %s97
      %p101 = pneg %p95
      %p102 = scmp.eq.s32.totalorder %s13, 1
      %p103 = por %p101, %p102
      %p104 = scmp.ne.s32.totalorder %s96, %s99
      %p105 = scmp.eq.s32.totalorder %s13, 0
      %p106 = por %p104, %p105
      %p107 = scmp.ne.s32.totalorder %s96, %s99
      %p108 = scmp.eq.s32.totalorder %s18, 1
      %p109 = por %p107, %p108
      %p110 = scmp.ne.s32.totalorder %s99, %s100
      %p111 = scmp.eq.s32.totalorder %s18, 0
      %p112 = por %p110, %p111
      %p113 = scmp.ne.s32.totalorder %s99, %s100
      %p114 = scmp.eq.s32.totalorder %s19, 1
      %p115 = por %p113, %p114
      %p117 = scmp.ne.s32.totalorder %s100, %s116
      %p118 = scmp.eq.s32.totalorder %s19, 0
      %p119 = por %p117, %p118
      %p120 = scmp.le.s32.totalorder 1, %s13
      %p121 = scmp.lt.s32.totalorder %s13, 3
      %p122 = pnand %p120, %p121
      %p123 = pneg %p122
      // Predicated region
      $region9: #{tpu_custom_call.1} parent=5 // pred_check
        _
      $region10: #{tpu_custom_call.1} parent=5 // pred_check_branch
        %125 = sbr.rel (%p122) target = $region12
      $region11: #{tpu_custom_call.1} parent=5 // pred_region
        %s126 = ssub.s32 %s13, 1
        // Predicated region
        $region13: #{tpu_custom_call.1} parent=11 // pred_check
          %p127 = pneg %p86
        $region14: #{tpu_custom_call.1} parent=11 // pred_check_branch
          %129 = sbr.rel (%p127) target = $region16
        $region15: #{tpu_custom_call.1} parent=11 // pred_region
          %131 = vsyncadd [#allocation3], 0
          %s132 = sshll.u32 %s2, 4
          %s133 = int_to_ptr.hbm [resolvable:$true] %s132
          %s134 = sshll.u32 [#allocation2], 4
          %s135 = int_to_ptr.vmem [resolvable:$true] %s134
          %140 = dma.hbm_to_vmem [thread:$0]  %s133, 3584, %s135, [#allocation3], 128, 128, 8
        $region16: #{tpu_custom_call.1} parent=11 // pred_fallthru
          _
      $region12: #{tpu_custom_call.1} parent=5 // pred_fallthru
        _
      %p141 = scmp.lt.s32.totalorder %s13, 2
      // Predicated region
      $region17: #{tpu_custom_call.1} parent=5 // pred_check
        %p142 = pneg %p141
      $region18: #{tpu_custom_call.1} parent=5 // pred_check_branch
        %144 = sbr.rel (%p142) target = $region20
      $region19: #{tpu_custom_call.1} parent=5 // pred_region
        // Predicated region
        $region21: #{tpu_custom_call.1} parent=19 // pred_check
          %p145 = pneg %p33
        $region22: #{tpu_custom_call.1} parent=19 // pred_check_branch
          %147 = sbr.rel (%p145) target = $region24
        $region23: #{tpu_custom_call.1} parent=19 // pred_region
          %s148 = smul.u32 16, %s13
          %p149 = scmp.lt.s32.totalorder %s148, 31
          %s150 = scalar_select %p149, %s148, 31
          %s151 = smul.addr %s150, 8
          %s152 = scalar_lea.vmem %s0, %s151
          %s153 = smul.u32 16, %s13
        $region24: #{tpu_custom_call.1} parent=19 // pred_fallthru
          _
        // Predicated region
        $region25: #{tpu_custom_call.1} parent=19 // pred_check
          %p154 = pneg %p59
        $region26: #{tpu_custom_call.1} parent=19 // pred_check_branch
          %156 = sbr.rel (%p154) target = $region28
        $region27: #{tpu_custom_call.1} parent=19 // pred_region
          %p157 = scmp.lt.s32.totalorder %s13, 1
          %s158 = scalar_select %p157, %s13, 1
          %s159 = smul.addr %s158, 16
          %s160 = smul.addr %s159, 8
          %s161 = scalar_lea.vmem %s1, %s160
        $region28: #{tpu_custom_call.1} parent=19 // pred_fallthru
          _
      $region20: #{tpu_custom_call.1} parent=5 // pred_fallthru
        _
      %p162 = scmp.le.s32.totalorder 1, %s13
      %p163 = scmp.lt.s32.totalorder %s13, 3
      %p164 = pnand %p162, %p163
      %p165 = pneg %p164
      // Predicated region
      $region29: #{tpu_custom_call.1} parent=5 // pred_check
        _
      $region30: #{tpu_custom_call.1} parent=5 // pred_check_branch
        %167 = sbr.rel (%p164) target = $region32
      $region31: #{tpu_custom_call.1} parent=5 // pred_region
        %s168 = ssub.s32 %s13, 1
        // Predicated region
        $region33: #{tpu_custom_call.1} parent=31 // pred_check
          %p169 = pneg %p86
        $region34: #{tpu_custom_call.1} parent=31 // pred_check_branch
          %171 = sbr.rel (%p169) target = $region36
        $region35: #{tpu_custom_call.1} parent=31 // pred_region
          %173 = dma.done [#allocation3], 3584
        $region36: #{tpu_custom_call.1} parent=31 // pred_fallthru
          _
        %s174 = smul.u32 16, %s18
        %p175 = scmp.lt.s32.totalorder %s174, 31
        %s176 = scalar_select %p175, %s174, 31
        %s177 = smul.addr %s176, 8
        %s178 = scalar_lea.vmem %s0, %s177
        %p179 = pneg %p39
        %p180 = pneg %p36
        %p181 = scmp.lt.s32.totalorder %s18, 1
        %s182 = scalar_select %p181, %s18, 1
        %s183 = smul.addr %s182, 16
        %s184 = smul.addr %s183, 8
        %s185 = scalar_lea.vmem %s1, %s184
        %p186 = pneg %p65
        %p187 = pneg %p62
        %p188 = pneg %p86
        %p189 = pneg %p83
        %p190 = pneg %p112
        %p191 = pneg %p109
        %s192 = sand.u32 %s99, 1
        %s193 = scalar_lea.sflag [#allocation4], %s192
        %s194 = sand.u32 %s99, 1
        %s195 = smul.addr %s194, 16
        %s196 = scalar_lea.vmem [#allocation5], %s195
        %s197 = smul.u32 16, %s18
        %p198 = scmp.lt.s32.totalorder %s197, 31
        %s199 = scalar_select %p198, %s197, 31
        %s200 = smul.addr %s199, 8
        %s201 = scalar_lea.vmem %s0, %s200
        %s202 = smul.u32 16, %s18
        %p203 = scmp.lt.s32.totalorder %s18, 1
        %s204 = scalar_select %p203, %s18, 1
        %s205 = smul.addr %s204, 16
        %s206 = smul.addr %s205, 8
        %s207 = scalar_lea.vmem %s1, %s206
        %s208 = smul.u32 2, %s18
        %v209 = vld [vmem:[%s201] sm:$0xff]
        %v210 = vld [vmem:[%s201 + $0x8] sm:$0xff]
        %v211 = vld [vmem:[%s201 + $0x10] sm:$0xff]
        %v212 = vld [vmem:[%s201 + $0x18] sm:$0xff]
        %v213 = vld [vmem:[%s201 + $0x20] sm:$0xff]
        %v214 = vld [vmem:[%s201 + $0x28] sm:$0xff]
        %v215 = vld [vmem:[%s201 + $0x30] sm:$0xff]
        %v216 = vld [vmem:[%s201 + $0x38] sm:$0xff]
        %v217 = vld [vmem:[%s201 + $0x40] sm:$0xff]
        %v218 = vld [vmem:[%s201 + $0x48] sm:$0xff]
        %v219 = vld [vmem:[%s201 + $0x50] sm:$0xff]
        %v220 = vld [vmem:[%s201 + $0x58] sm:$0xff]
        %v221 = vld [vmem:[%s201 + $0x60] sm:$0xff]
        %v222 = vld [vmem:[%s201 + $0x68] sm:$0xff]
        %v223 = vld [vmem:[%s201 + $0x70] sm:$0xff]
        %v224 = vld [vmem:[%s201 + $0x78] sm:$0xff]
        %v225 = vld [vmem:[%s207] sm:$0xff]
        %v226 = vld [vmem:[%s207 + $0x8] sm:$0xff]
        %v227 = vld [vmem:[%s207 + $0x10] sm:$0xff]
        %v228 = vld [vmem:[%s207 + $0x18] sm:$0xff]
        %v229 = vld [vmem:[%s207 + $0x20] sm:$0xff]
        %v230 = vld [vmem:[%s207 + $0x28] sm:$0xff]
        %v231 = vld [vmem:[%s207 + $0x30] sm:$0xff]
        %v232 = vld [vmem:[%s207 + $0x38] sm:$0xff]
        %v233 = vld [vmem:[%s207 + $0x40] sm:$0xff]
        %v234 = vld [vmem:[%s207 + $0x48] sm:$0xff]
        %v235 = vld [vmem:[%s207 + $0x50] sm:$0xff]
        %v236 = vld [vmem:[%s207 + $0x58] sm:$0xff]
        %v237 = vld [vmem:[%s207 + $0x60] sm:$0xff]
        %v238 = vld [vmem:[%s207 + $0x68] sm:$0xff]
        %v239 = vld [vmem:[%s207 + $0x70] sm:$0xff]
        %v240 = vld [vmem:[%s207 + $0x78] sm:$0xff]
        %v241 = vld [vmem:[#allocation2] sm:$0xff]
        %v242 = vld [vmem:[#allocation2 + $0x8] sm:$0xff]
        %v243 = vld [vmem:[#allocation2 + $0x10] sm:$0xff]
        %v244 = vld [vmem:[#allocation2 + $0x18] sm:$0xff]
        %v245 = vld [vmem:[#allocation2 + $0x20] sm:$0xff]
        %v246 = vld [vmem:[#allocation2 + $0x28] sm:$0xff]
        %v247 = vld [vmem:[#allocation2 + $0x30] sm:$0xff]
        %v248 = vld [vmem:[#allocation2 + $0x38] sm:$0xff]
        %v249 = vld [vmem:[#allocation2 + $0x40] sm:$0xff]
        %v250 = vld [vmem:[#allocation2 + $0x48] sm:$0xff]
        %v251 = vld [vmem:[#allocation2 + $0x50] sm:$0xff]
        %v252 = vld [vmem:[#allocation2 + $0x58] sm:$0xff]
        %v253 = vld [vmem:[#allocation2 + $0x60] sm:$0xff]
        %v254 = vld [vmem:[#allocation2 + $0x68] sm:$0xff]
        %v255 = vld [vmem:[#allocation2 + $0x70] sm:$0xff]
        %v256 = vld [vmem:[#allocation2 + $0x78] sm:$0xff]
        %v257 = vld [vmem:[#allocation2 + $0x80] sm:$0xff]
        %v258 = vld [vmem:[#allocation2 + $0x88] sm:$0xff]
        %v259 = vld [vmem:[#allocation2 + $0x90] sm:$0x3]
        %v260 = vld [vmem:[#allocation2 + $0x98] sm:$0x3]
        %v261 = vld [vmem:[#allocation2 + $0xa0] sm:$0x3]
        %v262 = vld [vmem:[#allocation2 + $0xa8] sm:$0x3]
        %v263 = vld [vmem:[#allocation2 + $0xb0] sm:$0x1]
        %v264 = vld [vmem:[#allocation2 + $0xb8] sm:$0x1]
        %v265 = vld [vmem:[#allocation2 + $0xc0] sm:$0x1]
        %v266 = vld [vmem:[#allocation2 + $0xc8] sm:$0x1]
        %v267 = vld [vmem:[#allocation2 + $0xd0] sm:$0xff]
        %v268 = vld [vmem:[#allocation2 + $0xd8] sm:$0xff]
        %vm269 = vcmask 130048
        %v271 = vsel %vm269, %v209, 0
        %v274 = vsel %vm269, %v210, 0
        %v277 = vsel %vm269, %v211, 0
        %v280 = vsel %vm269, %v212, 0
        %v283 = vsel %vm269, %v213, 0
        %v286 = vsel %vm269, %v214, 0
        %v289 = vsel %vm269, %v215, 0
        %v292 = vsel %vm269, %v216, 0
        %v295 = vsel %vm269, %v217, 0
        %v298 = vsel %vm269, %v218, 0
        %v301 = vsel %vm269, %v219, 0
        %v304 = vsel %vm269, %v220, 0
        %v307 = vsel %vm269, %v221, 0
        %v310 = vsel %vm269, %v222, 0
        %v313 = vsel %vm269, %v223, 0
        %v316 = vsel %vm269, %v224, 0
        %318 = vmatpush.msra.mxu0 0.0
        %319 = vmatpush.msra.mxu0 0.0
        %320 = vmatpush.msra.mxu0 0.0
        %321 = vmatpush.msra.mxu0 0.0
        %322 = vmatpush.msra.mxu0 0.0
        %323 = vmatpush.msra.mxu0 0.0
        %324 = vmatpush.msra.mxu0 0.0
        %325 = vmatpush.msra.mxu0 0.0
        %326 = vmatpush.msra.mxu0 0.0
        %327 = vmatpush.msra.mxu0 0.0
        %328 = vmatpush.msra.mxu0 0.0
        %329 = vmatpush.msra.mxu0 0.0
        %330 = vmatpush.msra.mxu0 0.0
        %331 = vmatpush.msra.mxu0 0.0
        %332 = vmatpush.msra.mxu0 %v242
        %333 = vmatpush.msra.mxu0 %v241
        %334 = vmatmul.f32.gmra.mxu0 %v271
        %v335 = vpop.f32.mrf.mxu0
        %v336 = vadd.f32 0.0, %v335
        %337 = vmatmul.f32.gmra.mxu0 %v274
        %v338 = vpop.f32.mrf.mxu0
        %v339 = vadd.f32 0.0, %v338
        %340 = vmatmul.f32.gmra.mxu0 %v277
        %v341 = vpop.f32.mrf.mxu0
        %v342 = vadd.f32 0.0, %v341
        %343 = vmatmul.f32.gmra.mxu0 %v280
        %v344 = vpop.f32.mrf.mxu0
        %v345 = vadd.f32 0.0, %v344
        %346 = vmatmul.f32.gmra.mxu0 %v283
        %v347 = vpop.f32.mrf.mxu0
        %v348 = vadd.f32 0.0, %v347
        %349 = vmatmul.f32.gmra.mxu0 %v286
        %v350 = vpop.f32.mrf.mxu0
        %v351 = vadd.f32 0.0, %v350
        %352 = vmatmul.f32.gmra.mxu0 %v289
        %v353 = vpop.f32.mrf.mxu0
        %v354 = vadd.f32 0.0, %v353
        %355 = vmatmul.f32.gmra.mxu0 %v292
        %v356 = vpop.f32.mrf.mxu0
        %v357 = vadd.f32 0.0, %v356
        %358 = vmatmul.f32.gmra.mxu0 %v295
        %v359 = vpop.f32.mrf.mxu0
        %v360 = vadd.f32 0.0, %v359
        %361 = vmatmul.f32.gmra.mxu0 %v298
        %v362 = vpop.f32.mrf.mxu0
        %v363 = vadd.f32 0.0, %v362
        %364 = vmatmul.f32.gmra.mxu0 %v301
        %v365 = vpop.f32.mrf.mxu0
        %v366 = vadd.f32 0.0, %v365
        %367 = vmatmul.f32.gmra.mxu0 %v304
        %v368 = vpop.f32.mrf.mxu0
        %v369 = vadd.f32 0.0, %v368
        %370 = vmatmul.f32.gmra.mxu0 %v307
        %v371 = vpop.f32.mrf.mxu0
        %v372 = vadd.f32 0.0, %v371
        %373 = vmatmul.f32.gmra.mxu0 %v310
        %v374 = vpop.f32.mrf.mxu0
        %v375 = vadd.f32 0.0, %v374
        %376 = vmatmul.f32.gmra.mxu0 %v313
        %v377 = vpop.f32.mrf.mxu0
        %v378 = vadd.f32 0.0, %v377
        %379 = vmatmul.f32.gmra.mxu0 %v316
        %v380 = vpop.f32.mrf.mxu0
        %v381 = vadd.f32 0.0, %v380
        %382 = vdwg.mxu0
        %v383 = vperm.slane %v260, 0
        %v384 = vmul.f32 %v336, %v383
        %v385 = vmul.f32 %v339, %v383
        %v386 = vmul.f32 %v342, %v383
        %v387 = vmul.f32 %v345, %v383
        %v388 = vmul.f32 %v348, %v383
        %v389 = vmul.f32 %v351, %v383
        %v390 = vmul.f32 %v354, %v383
        %v391 = vmul.f32 %v357, %v383
        %v392 = vmul.f32 %v360, %v383
        %v393 = vmul.f32 %v363, %v383
        %v394 = vmul.f32 %v366, %v383
        %v395 = vmul.f32 %v369, %v383
        %v396 = vmul.f32 %v372, %v383
        %v397 = vmul.f32 %v375, %v383
        %v398 = vmul.f32 %v378, %v383
        %v399 = vmul.f32 %v381, %v383
        %vm400 = vcmask 261120
        %v401 = vsel %vm400, %v384, 0.0
        %402 = vadd.xlane.f32.xlu0 %v401
        %v403 = vpop.xlane.xlu0 %402
        %v404 = vsel %vm400, %v385, 0.0
        %405 = vadd.xlane.f32.xlu0 %v404
        %v406 = vpop.xlane.xlu0 %405
        %v407 = vsel %vm400, %v386, 0.0
        %408 = vadd.xlane.f32.xlu0 %v407
        %v409 = vpop.xlane.xlu0 %408
        %v410 = vsel %vm400, %v387, 0.0
        %411 = vadd.xlane.f32.xlu0 %v410
        %v412 = vpop.xlane.xlu0 %411
        %v413 = vsel %vm400, %v388, 0.0
        %414 = vadd.xlane.f32.xlu0 %v413
        %v415 = vpop.xlane.xlu0 %414
        %v416 = vsel %vm400, %v389, 0.0
        %417 = vadd.xlane.f32.xlu0 %v416
        %v418 = vpop.xlane.xlu0 %417
        %v419 = vsel %vm400, %v390, 0.0
        %420 = vadd.xlane.f32.xlu0 %v419
        %v421 = vpop.xlane.xlu0 %420
        %v422 = vsel %vm400, %v391, 0.0
        %423 = vadd.xlane.f32.xlu0 %v422
        %v424 = vpop.xlane.xlu0 %423
        %v425 = vsel %vm400, %v392, 0.0
        %426 = vadd.xlane.f32.xlu0 %v425
        %v427 = vpop.xlane.xlu0 %426
        %v428 = vsel %vm400, %v393, 0.0
        %429 = vadd.xlane.f32.xlu0 %v428
        %v430 = vpop.xlane.xlu0 %429
        %v431 = vsel %vm400, %v394, 0.0
        %432 = vadd.xlane.f32.xlu0 %v431
        %v433 = vpop.xlane.xlu0 %432
        %v434 = vsel %vm400, %v395, 0.0
        %435 = vadd.xlane.f32.xlu0 %v434
        %v436 = vpop.xlane.xlu0 %435
        %v437 = vsel %vm400, %v396, 0.0
        %438 = vadd.xlane.f32.xlu0 %v437
        %v439 = vpop.xlane.xlu0 %438
        %v440 = vsel %vm400, %v397, 0.0
        %441 = vadd.xlane.f32.xlu0 %v440
        %v442 = vpop.xlane.xlu0 %441
        %v443 = vsel %vm400, %v398, 0.0
        %444 = vadd.xlane.f32.xlu0 %v443
        %v445 = vpop.xlane.xlu0 %444
        %v446 = vsel %vm400, %v399, 0.0
        %447 = vadd.xlane.f32.xlu0 %v446
        %v448 = vpop.xlane.xlu0 %447
        %v450 = vsel %vm400, %v259, 0
        %v453 = vsel %vm400, %v336, 0
        %v456 = vsel %vm400, %v339, 0
        %v459 = vsel %vm400, %v342, 0
        %v462 = vsel %vm400, %v345, 0
        %v465 = vsel %vm400, %v348, 0
        %v468 = vsel %vm400, %v351, 0
        %v471 = vsel %vm400, %v354, 0
        %v474 = vsel %vm400, %v357, 0
        %v477 = vsel %vm400, %v360, 0
        %v480 = vsel %vm400, %v363, 0
        %v483 = vsel %vm400, %v366, 0
        %v486 = vsel %vm400, %v369, 0
        %v489 = vsel %vm400, %v372, 0
        %v492 = vsel %vm400, %v375, 0
        %v495 = vsel %vm400, %v378, 0
        %v498 = vsel %vm400, %v381, 0
        %500 = vmatpush.xpose.msra.mxu0 %v498
        %501 = vmatpush.xpose.msra.mxu0 %v495
        %502 = vmatpush.xpose.msra.mxu0 %v492
        %503 = vmatpush.xpose.msra.mxu0 %v489
        %504 = vmatpush.xpose.msra.mxu0 %v486
        %505 = vmatpush.xpose.msra.mxu0 %v483
        %506 = vmatpush.xpose.msra.mxu0 %v480
        %507 = vmatpush.xpose.msra.mxu0 %v477
        %508 = vmatpush.xpose.msra.mxu0 %v474
        %509 = vmatpush.xpose.msra.mxu0 %v471
        %510 = vmatpush.xpose.msra.mxu0 %v468
        %511 = vmatpush.xpose.msra.mxu0 %v465
        %512 = vmatpush.xpose.msra.mxu0 %v462
        %513 = vmatpush.xpose.msra.mxu0 %v459
        %514 = vmatpush.xpose.msra.mxu0 %v456
        %515 = vmatpush.xpose.msra.mxu0 %v453
        %516 = vmatmul.f32.gmra.mxu0 %v450
        %v517 = vpop.f32.mrf.mxu0
        %v518 = vadd.f32 0.0, %v517
        %519 = vdwg.mxu0
        %v520 = vperm.slane %v518, 0
        %v521 = vadd.f32 %v403, %v520
        %v522 = vadd.f32 %v406, %v520
        %v523 = vadd.f32 %v409, %v520
        %v524 = vadd.f32 %v412, %v520
        %v525 = vadd.f32 %v415, %v520
        %v526 = vadd.f32 %v418, %v520
        %v527 = vadd.f32 %v421, %v520
        %v528 = vadd.f32 %v424, %v520
        %v529 = vadd.f32 %v427, %v520
        %v530 = vadd.f32 %v430, %v520
        %v531 = vadd.f32 %v433, %v520
        %v532 = vadd.f32 %v436, %v520
        %v533 = vadd.f32 %v439, %v520
        %v534 = vadd.f32 %v442, %v520
        %v535 = vadd.f32 %v445, %v520
        %v536 = vadd.f32 %v448, %v520
        %vm537 = vcmp.gt.f32.partialorder %v521, 0.0
        %vm538 = vcmp.gt.f32.partialorder %v522, 0.0
        %vm539 = vcmp.gt.f32.partialorder %v523, 0.0
        %vm540 = vcmp.gt.f32.partialorder %v524, 0.0
        %vm541 = vcmp.gt.f32.partialorder %v525, 0.0
        %vm542 = vcmp.gt.f32.partialorder %v526, 0.0
        %vm543 = vcmp.gt.f32.partialorder %v527, 0.0
        %vm544 = vcmp.gt.f32.partialorder %v528, 0.0
        %vm545 = vcmp.gt.f32.partialorder %v529, 0.0
        %vm546 = vcmp.gt.f32.partialorder %v530, 0.0
        %vm547 = vcmp.gt.f32.partialorder %v531, 0.0
        %vm548 = vcmp.gt.f32.partialorder %v532, 0.0
        %vm549 = vcmp.gt.f32.partialorder %v533, 0.0
        %vm550 = vcmp.gt.f32.partialorder %v534, 0.0
        %vm551 = vcmp.gt.f32.partialorder %v535, 0.0
        %vm552 = vcmp.gt.f32.partialorder %v536, 0.0
        %v553 = vmul.f32 %v521, 0.2
        %v554 = vmul.f32 %v522, 0.2
        %v555 = vmul.f32 %v523, 0.2
        %v556 = vmul.f32 %v524, 0.2
        %v557 = vmul.f32 %v525, 0.2
        %v558 = vmul.f32 %v526, 0.2
        %v559 = vmul.f32 %v527, 0.2
        %v560 = vmul.f32 %v528, 0.2
        %v561 = vmul.f32 %v529, 0.2
        %v562 = vmul.f32 %v530, 0.2
        %v563 = vmul.f32 %v531, 0.2
        %v564 = vmul.f32 %v532, 0.2
        %v565 = vmul.f32 %v533, 0.2
        %v566 = vmul.f32 %v534, 0.2
        %v567 = vmul.f32 %v535, 0.2
        %v568 = vmul.f32 %v536, 0.2
        %v569 = vsel %vm537, %v521, %v553
        %v570 = vsel %vm538, %v522, %v554
        %v571 = vsel %vm539, %v523, %v555
        %v572 = vsel %vm540, %v524, %v556
        %v573 = vsel %vm541, %v525, %v557
        %v574 = vsel %vm542, %v526, %v558
        %v575 = vsel %vm543, %v527, %v559
        %v576 = vsel %vm544, %v528, %v560
        %v577 = vsel %vm545, %v529, %v561
        %v578 = vsel %vm546, %v530, %v562
        %v579 = vsel %vm547, %v531, %v563
        %v580 = vsel %vm548, %v532, %v564
        %v581 = vsel %vm549, %v533, %v565
        %v582 = vsel %vm550, %v534, %v566
        %v583 = vsel %vm551, %v535, %v567
        %v584 = vsel %vm552, %v536, %v568
        %v585 = vadd.f32 %v569, %v225
        %v586 = vadd.f32 %v570, %v226
        %v587 = vadd.f32 %v571, %v227
        %v588 = vadd.f32 %v572, %v228
        %v589 = vadd.f32 %v573, %v229
        %v590 = vadd.f32 %v574, %v230
        %v591 = vadd.f32 %v575, %v231
        %v592 = vadd.f32 %v576, %v232
        %v593 = vadd.f32 %v577, %v233
        %v594 = vadd.f32 %v578, %v234
        %v595 = vadd.f32 %v579, %v235
        %v596 = vadd.f32 %v580, %v236
        %v597 = vadd.f32 %v581, %v237
        %v598 = vadd.f32 %v582, %v238
        %v599 = vadd.f32 %v583, %v239
        %v600 = vadd.f32 %v584, %v240
        %601 = vmax.xlane.f32.xlu0 %v585
        %v602 = vpop.xlane.xlu0 %601
        %603 = vmax.xlane.f32.xlu0 %v586
        %v604 = vpop.xlane.xlu0 %603
        %605 = vmax.xlane.f32.xlu0 %v587
        %v606 = vpop.xlane.xlu0 %605
        %607 = vmax.xlane.f32.xlu0 %v588
        %v608 = vpop.xlane.xlu0 %607
        %609 = vmax.xlane.f32.xlu0 %v589
        %v610 = vpop.xlane.xlu0 %609
        %611 = vmax.xlane.f32.xlu0 %v590
        %v612 = vpop.xlane.xlu0 %611
        %613 = vmax.xlane.f32.xlu0 %v591
        %v614 = vpop.xlane.xlu0 %613
        %615 = vmax.xlane.f32.xlu0 %v592
        %v616 = vpop.xlane.xlu0 %615
        %617 = vmax.xlane.f32.xlu0 %v593
        %v618 = vpop.xlane.xlu0 %617
        %619 = vmax.xlane.f32.xlu0 %v594
        %v620 = vpop.xlane.xlu0 %619
        %621 = vmax.xlane.f32.xlu0 %v595
        %v622 = vpop.xlane.xlu0 %621
        %623 = vmax.xlane.f32.xlu0 %v596
        %v624 = vpop.xlane.xlu0 %623
        %625 = vmax.xlane.f32.xlu0 %v597
        %v626 = vpop.xlane.xlu0 %625
        %627 = vmax.xlane.f32.xlu0 %v598
        %v628 = vpop.xlane.xlu0 %627
        %629 = vmax.xlane.f32.xlu0 %v599
        %v630 = vpop.xlane.xlu0 %629
        %631 = vmax.xlane.f32.xlu0 %v600
        %v632 = vpop.xlane.xlu0 %631
        %v633 = vsub.f32 %v585, %v602
        %v634 = vsub.f32 %v586, %v604
        %v635 = vsub.f32 %v587, %v606
        %v636 = vsub.f32 %v588, %v608
        %v637 = vsub.f32 %v589, %v610
        %v638 = vsub.f32 %v590, %v612
        %v639 = vsub.f32 %v591, %v614
        %v640 = vsub.f32 %v592, %v616
        %v641 = vsub.f32 %v593, %v618
        %v642 = vsub.f32 %v594, %v620
        %v643 = vsub.f32 %v595, %v622
        %v644 = vsub.f32 %v596, %v624
        %v645 = vsub.f32 %v597, %v626
        %v646 = vsub.f32 %v598, %v628
        %v647 = vsub.f32 %v599, %v630
        %v648 = vsub.f32 %v600, %v632
        %v649 = vmul.f32 %v633, 1.442695
        %v650 = vpow.pop %v649
        %v651 = vmul.f32 %v634, 1.442695
        %v652 = vpow.pop %v651
        %v653 = vmul.f32 %v635, 1.442695
        %v654 = vpow.pop %v653
        %v655 = vmul.f32 %v636, 1.442695
        %v656 = vpow.pop %v655
        %v657 = vmul.f32 %v637, 1.442695
        %v658 = vpow.pop %v657
        %v659 = vmul.f32 %v638, 1.442695
        %v660 = vpow.pop %v659
        %v661 = vmul.f32 %v639, 1.442695
        %v662 = vpow.pop %v661
        %v663 = vmul.f32 %v640, 1.442695
        %v664 = vpow.pop %v663
        %v665 = vmul.f32 %v641, 1.442695
        %v666 = vpow.pop %v665
        %v667 = vmul.f32 %v642, 1.442695
        %v668 = vpow.pop %v667
        %v669 = vmul.f32 %v643, 1.442695
        %v670 = vpow.pop %v669
        %v671 = vmul.f32 %v644, 1.442695
        %v672 = vpow.pop %v671
        %v673 = vmul.f32 %v645, 1.442695
        %v674 = vpow.pop %v673
        %v675 = vmul.f32 %v646, 1.442695
        %v676 = vpow.pop %v675
        %v677 = vmul.f32 %v647, 1.442695
        %v678 = vpow.pop %v677
        %v679 = vmul.f32 %v648, 1.442695
        %v680 = vpow.pop %v679
        %681 = vadd.xlane.f32.xlu0 %v650
        %v682 = vpop.xlane.xlu0 %681
        %683 = vadd.xlane.f32.xlu0 %v652
        %v684 = vpop.xlane.xlu0 %683
        %685 = vadd.xlane.f32.xlu0 %v654
        %v686 = vpop.xlane.xlu0 %685
        %687 = vadd.xlane.f32.xlu0 %v656
        %v688 = vpop.xlane.xlu0 %687
        %689 = vadd.xlane.f32.xlu0 %v658
        %v690 = vpop.xlane.xlu0 %689
        %691 = vadd.xlane.f32.xlu0 %v660
        %v692 = vpop.xlane.xlu0 %691
        %693 = vadd.xlane.f32.xlu0 %v662
        %v694 = vpop.xlane.xlu0 %693
        %695 = vadd.xlane.f32.xlu0 %v664
        %v696 = vpop.xlane.xlu0 %695
        %697 = vadd.xlane.f32.xlu0 %v666
        %v698 = vpop.xlane.xlu0 %697
        %699 = vadd.xlane.f32.xlu0 %v668
        %v700 = vpop.xlane.xlu0 %699
        %701 = vadd.xlane.f32.xlu0 %v670
        %v702 = vpop.xlane.xlu0 %701
        %703 = vadd.xlane.f32.xlu0 %v672
        %v704 = vpop.xlane.xlu0 %703
        %705 = vadd.xlane.f32.xlu0 %v674
        %v706 = vpop.xlane.xlu0 %705
        %707 = vadd.xlane.f32.xlu0 %v676
        %v708 = vpop.xlane.xlu0 %707
        %709 = vadd.xlane.f32.xlu0 %v678
        %v710 = vpop.xlane.xlu0 %709
        %711 = vadd.xlane.f32.xlu0 %v680
        %v712 = vpop.xlane.xlu0 %711
        %v713 = vrcp.pop %v682
        %v714 = vrcp.pop %v684
        %v715 = vrcp.pop %v686
        %v716 = vrcp.pop %v688
        %v717 = vrcp.pop %v690
        %v718 = vrcp.pop %v692
        %v719 = vrcp.pop %v694
        %v720 = vrcp.pop %v696
        %v721 = vrcp.pop %v698
        %v722 = vrcp.pop %v700
        %v723 = vrcp.pop %v702
        %v724 = vrcp.pop %v704
        %v725 = vrcp.pop %v706
        %v726 = vrcp.pop %v708
        %v727 = vrcp.pop %v710
        %v728 = vrcp.pop %v712
        %v729 = vmul.f32 %v650, %v713
        %v730 = vmul.f32 %v652, %v714
        %v731 = vmul.f32 %v654, %v715
        %v732 = vmul.f32 %v656, %v716
        %v733 = vmul.f32 %v658, %v717
        %v734 = vmul.f32 %v660, %v718
        %v735 = vmul.f32 %v662, %v719
        %v736 = vmul.f32 %v664, %v720
        %v737 = vmul.f32 %v666, %v721
        %v738 = vmul.f32 %v668, %v722
        %v739 = vmul.f32 %v670, %v723
        %v740 = vmul.f32 %v672, %v724
        %v741 = vmul.f32 %v674, %v725
        %v742 = vmul.f32 %v676, %v726
        %v743 = vmul.f32 %v678, %v727
        %v744 = vmul.f32 %v680, %v728
        %745 = vmatpush.msra.mxu0 %v381
        %746 = vmatpush.msra.mxu0 %v378
        %747 = vmatpush.msra.mxu0 %v375
        %748 = vmatpush.msra.mxu0 %v372
        %749 = vmatpush.msra.mxu0 %v369
        %750 = vmatpush.msra.mxu0 %v366
        %751 = vmatpush.msra.mxu0 %v363
        %752 = vmatpush.msra.mxu0 %v360
        %753 = vmatpush.msra.mxu0 %v357
        %754 = vmatpush.msra.mxu0 %v354
        %755 = vmatpush.msra.mxu0 %v351
        %756 = vmatpush.msra.mxu0 %v348
        %757 = vmatpush.msra.mxu0 %v345
        %758 = vmatpush.msra.mxu0 %v342
        %759 = vmatpush.msra.mxu0 %v339
        %760 = vmatpush.msra.mxu0 %v336
        %761 = vmatmul.f32.gmra.mxu0 %v729
        %v762 = vpop.f32.mrf.mxu0
        %v763 = vadd.f32 0.0, %v762
        %764 = vmatmul.f32.gmra.mxu0 %v730
        %v765 = vpop.f32.mrf.mxu0
        %v766 = vadd.f32 0.0, %v765
        %767 = vmatmul.f32.gmra.mxu0 %v731
        %v768 = vpop.f32.mrf.mxu0
        %v769 = vadd.f32 0.0, %v768
        %770 = vmatmul.f32.gmra.mxu0 %v732
        %v771 = vpop.f32.mrf.mxu0
        %v772 = vadd.f32 0.0, %v771
        %773 = vmatmul.f32.gmra.mxu0 %v733
        %v774 = vpop.f32.mrf.mxu0
        %v775 = vadd.f32 0.0, %v774
        %776 = vmatmul.f32.gmra.mxu0 %v734
        %v777 = vpop.f32.mrf.mxu0
        %v778 = vadd.f32 0.0, %v777
        %779 = vmatmul.f32.gmra.mxu0 %v735
        %v780 = vpop.f32.mrf.mxu0
        %v781 = vadd.f32 0.0, %v780
        %782 = vmatmul.f32.gmra.mxu0 %v736
        %v783 = vpop.f32.mrf.mxu0
        %v784 = vadd.f32 0.0, %v783
        %785 = vmatmul.f32.gmra.mxu0 %v737
        %v786 = vpop.f32.mrf.mxu0
        %v787 = vadd.f32 0.0, %v786
        %788 = vmatmul.f32.gmra.mxu0 %v738
        %v789 = vpop.f32.mrf.mxu0
        %v790 = vadd.f32 0.0, %v789
        %791 = vmatmul.f32.gmra.mxu0 %v739
        %v792 = vpop.f32.mrf.mxu0
        %v793 = vadd.f32 0.0, %v792
        %794 = vmatmul.f32.gmra.mxu0 %v740
        %v795 = vpop.f32.mrf.mxu0
        %v796 = vadd.f32 0.0, %v795
        %797 = vmatmul.f32.gmra.mxu0 %v741
        %v798 = vpop.f32.mrf.mxu0
        %v799 = vadd.f32 0.0, %v798
        %800 = vmatmul.f32.gmra.mxu0 %v742
        %v801 = vpop.f32.mrf.mxu0
        %v802 = vadd.f32 0.0, %v801
        %803 = vmatmul.f32.gmra.mxu0 %v743
        %v804 = vpop.f32.mrf.mxu0
        %v805 = vadd.f32 0.0, %v804
        %806 = vmatmul.f32.gmra.mxu0 %v744
        %v807 = vpop.f32.mrf.mxu0
        %v808 = vadd.f32 0.0, %v807
        %809 = vdwg.mxu0
        %v810 = vperm.slane %v260, 1
        %812 = vrot.lane.b32.xlu0 %v810, 32
        %v813 = vpop.permute.xlu0 %812
        %v815 = vmul.f32 %v336, %v813
        %v816 = vmul.f32 %v339, %v813
        %v817 = vmul.f32 %v342, %v813
        %v818 = vmul.f32 %v345, %v813
        %v819 = vmul.f32 %v348, %v813
        %v820 = vmul.f32 %v351, %v813
        %v821 = vmul.f32 %v354, %v813
        %v822 = vmul.f32 %v357, %v813
        %v823 = vmul.f32 %v360, %v813
        %v824 = vmul.f32 %v363, %v813
        %v825 = vmul.f32 %v366, %v813
        %v826 = vmul.f32 %v369, %v813
        %v827 = vmul.f32 %v372, %v813
        %v828 = vmul.f32 %v375, %v813
        %v829 = vmul.f32 %v378, %v813
        %v830 = vmul.f32 %v381, %v813
        %847 = vrot.lane.b32.xlu0 %v815, 96
        %v848 = vpop.permute.xlu0 %847
        %849 = vrot.lane.b32.xlu0 %v816, 96
        %v850 = vpop.permute.xlu0 %849
        %851 = vrot.lane.b32.xlu0 %v817, 96
        %v852 = vpop.permute.xlu0 %851
        %853 = vrot.lane.b32.xlu0 %v818, 96
        %v854 = vpop.permute.xlu0 %853
        %855 = vrot.lane.b32.xlu0 %v819, 96
        %v856 = vpop.permute.xlu0 %855
        %857 = vrot.lane.b32.xlu0 %v820, 96
        %v858 = vpop.permute.xlu0 %857
        %859 = vrot.lane.b32.xlu0 %v821, 96
        %v860 = vpop.permute.xlu0 %859
        %861 = vrot.lane.b32.xlu0 %v822, 96
        %v862 = vpop.permute.xlu0 %861
        %863 = vrot.lane.b32.xlu0 %v823, 96
        %v864 = vpop.permute.xlu0 %863
        %865 = vrot.lane.b32.xlu0 %v824, 96
        %v866 = vpop.permute.xlu0 %865
        %867 = vrot.lane.b32.xlu0 %v825, 96
        %v868 = vpop.permute.xlu0 %867
        %869 = vrot.lane.b32.xlu0 %v826, 96
        %v870 = vpop.permute.xlu0 %869
        %871 = vrot.lane.b32.xlu0 %v827, 96
        %v872 = vpop.permute.xlu0 %871
        %873 = vrot.lane.b32.xlu0 %v828, 96
        %v874 = vpop.permute.xlu0 %873
        %875 = vrot.lane.b32.xlu0 %v829, 96
        %v876 = vpop.permute.xlu0 %875
        %877 = vrot.lane.b32.xlu0 %v830, 96
        %v878 = vpop.permute.xlu0 %877
        %v895 = vsel %vm400, %v848, 0.0
        %896 = vadd.xlane.f32.xlu0 %v895
        %v897 = vpop.xlane.xlu0 %896
        %v898 = vsel %vm400, %v850, 0.0
        %899 = vadd.xlane.f32.xlu0 %v898
        %v900 = vpop.xlane.xlu0 %899
        %v901 = vsel %vm400, %v852, 0.0
        %902 = vadd.xlane.f32.xlu0 %v901
        %v903 = vpop.xlane.xlu0 %902
        %v904 = vsel %vm400, %v854, 0.0
        %905 = vadd.xlane.f32.xlu0 %v904
        %v906 = vpop.xlane.xlu0 %905
        %v907 = vsel %vm400, %v856, 0.0
        %908 = vadd.xlane.f32.xlu0 %v907
        %v909 = vpop.xlane.xlu0 %908
        %v910 = vsel %vm400, %v858, 0.0
        %911 = vadd.xlane.f32.xlu0 %v910
        %v912 = vpop.xlane.xlu0 %911
        %v913 = vsel %vm400, %v860, 0.0
        %914 = vadd.xlane.f32.xlu0 %v913
        %v915 = vpop.xlane.xlu0 %914
        %v916 = vsel %vm400, %v862, 0.0
        %917 = vadd.xlane.f32.xlu0 %v916
        %v918 = vpop.xlane.xlu0 %917
        %v919 = vsel %vm400, %v864, 0.0
        %920 = vadd.xlane.f32.xlu0 %v919
        %v921 = vpop.xlane.xlu0 %920
        %v922 = vsel %vm400, %v866, 0.0
        %923 = vadd.xlane.f32.xlu0 %v922
        %v924 = vpop.xlane.xlu0 %923
        %v925 = vsel %vm400, %v868, 0.0
        %926 = vadd.xlane.f32.xlu0 %v925
        %v927 = vpop.xlane.xlu0 %926
        %v928 = vsel %vm400, %v870, 0.0
        %929 = vadd.xlane.f32.xlu0 %v928
        %v930 = vpop.xlane.xlu0 %929
        %v931 = vsel %vm400, %v872, 0.0
        %932 = vadd.xlane.f32.xlu0 %v931
        %v933 = vpop.xlane.xlu0 %932
        %v934 = vsel %vm400, %v874, 0.0
        %935 = vadd.xlane.f32.xlu0 %v934
        %v936 = vpop.xlane.xlu0 %935
        %v937 = vsel %vm400, %v876, 0.0
        %938 = vadd.xlane.f32.xlu0 %v937
        %v939 = vpop.xlane.xlu0 %938
        %v940 = vsel %vm400, %v878, 0.0
        %941 = vadd.xlane.f32.xlu0 %v940
        %v942 = vpop.xlane.xlu0 %941
        %v943 = vrot.slane %v259, 1
        %944 = vrot.lane.b32.xlu0 %v336, 96
        %v945 = vpop.permute.xlu0 %944
        %946 = vrot.lane.b32.xlu0 %v339, 96
        %v947 = vpop.permute.xlu0 %946
        %948 = vrot.lane.b32.xlu0 %v342, 96
        %v949 = vpop.permute.xlu0 %948
        %950 = vrot.lane.b32.xlu0 %v345, 96
        %v951 = vpop.permute.xlu0 %950
        %952 = vrot.lane.b32.xlu0 %v348, 96
        %v953 = vpop.permute.xlu0 %952
        %954 = vrot.lane.b32.xlu0 %v351, 96
        %v955 = vpop.permute.xlu0 %954
        %956 = vrot.lane.b32.xlu0 %v354, 96
        %v957 = vpop.permute.xlu0 %956
        %958 = vrot.lane.b32.xlu0 %v357, 96
        %v959 = vpop.permute.xlu0 %958
        %960 = vrot.lane.b32.xlu0 %v360, 96
        %v961 = vpop.permute.xlu0 %960
        %962 = vrot.lane.b32.xlu0 %v363, 96
        %v963 = vpop.permute.xlu0 %962
        %964 = vrot.lane.b32.xlu0 %v366, 96
        %v965 = vpop.permute.xlu0 %964
        %966 = vrot.lane.b32.xlu0 %v369, 96
        %v967 = vpop.permute.xlu0 %966
        %968 = vrot.lane.b32.xlu0 %v372, 96
        %v969 = vpop.permute.xlu0 %968
        %970 = vrot.lane.b32.xlu0 %v375, 96
        %v971 = vpop.permute.xlu0 %970
        %972 = vrot.lane.b32.xlu0 %v378, 96
        %v973 = vpop.permute.xlu0 %972
        %974 = vrot.lane.b32.xlu0 %v381, 96
        %v975 = vpop.permute.xlu0 %974
        %v976 = vsel %vm400, %v943, 0
        %v978 = vsel %vm400, %v945, 0
        %v980 = vsel %vm400, %v947, 0
        %v982 = vsel %vm400, %v949, 0
        %v984 = vsel %vm400, %v951, 0
        %v986 = vsel %vm400, %v953, 0
        %v988 = vsel %vm400, %v955, 0
        %v990 = vsel %vm400, %v957, 0
        %v992 = vsel %vm400, %v959, 0
        %v994 = vsel %vm400, %v961, 0
        %v996 = vsel %vm400, %v963, 0
        %v998 = vsel %vm400, %v965, 0
        %v1000 = vsel %vm400, %v967, 0
        %v1002 = vsel %vm400, %v969, 0
        %v1004 = vsel %vm400, %v971, 0
        %v1006 = vsel %vm400, %v973, 0
        %v1008 = vsel %vm400, %v975, 0
        %1010 = vmatpush.xpose.msra.mxu0 %v1008
        %1011 = vmatpush.xpose.msra.mxu0 %v1006
        %1012 = vmatpush.xpose.msra.mxu0 %v1004
        %1013 = vmatpush.xpose.msra.mxu0 %v1002
        %1014 = vmatpush.xpose.msra.mxu0 %v1000
        %1015 = vmatpush.xpose.msra.mxu0 %v998
        %1016 = vmatpush.xpose.msra.mxu0 %v996
        %1017 = vmatpush.xpose.msra.mxu0 %v994
        %1018 = vmatpush.xpose.msra.mxu0 %v992
        %1019 = vmatpush.xpose.msra.mxu0 %v990
        %1020 = vmatpush.xpose.msra.mxu0 %v988
        %1021 = vmatpush.xpose.msra.mxu0 %v986
        %1022 = vmatpush.xpose.msra.mxu0 %v984
        %1023 = vmatpush.xpose.msra.mxu0 %v982
        %1024 = vmatpush.xpose.msra.mxu0 %v980
        %1025 = vmatpush.xpose.msra.mxu0 %v978
        %1026 = vmatmul.f32.gmra.mxu0 %v976
        %v1027 = vpop.f32.mrf.mxu0
        %v1028 = vadd.f32 0.0, %v1027
        %1029 = vdwg.mxu0
        %v1030 = vperm.slane %v1028, 0
        %v1031 = vadd.f32 %v897, %v1030
        %v1032 = vadd.f32 %v900, %v1030
        %v1033 = vadd.f32 %v903, %v1030
        %v1034 = vadd.f32 %v906, %v1030
        %v1035 = vadd.f32 %v909, %v1030
        %v1036 = vadd.f32 %v912, %v1030
        %v1037 = vadd.f32 %v915, %v1030
        %v1038 = vadd.f32 %v918, %v1030
        %v1039 = vadd.f32 %v921, %v1030
        %v1040 = vadd.f32 %v924, %v1030
        %v1041 = vadd.f32 %v927, %v1030
        %v1042 = vadd.f32 %v930, %v1030
        %v1043 = vadd.f32 %v933, %v1030
        %v1044 = vadd.f32 %v936, %v1030
        %v1045 = vadd.f32 %v939, %v1030
        %v1046 = vadd.f32 %v942, %v1030
        %vm1047 = vcmp.gt.f32.partialorder %v1031, 0.0
        %vm1048 = vcmp.gt.f32.partialorder %v1032, 0.0
        %vm1049 = vcmp.gt.f32.partialorder %v1033, 0.0
        %vm1050 = vcmp.gt.f32.partialorder %v1034, 0.0
        %vm1051 = vcmp.gt.f32.partialorder %v1035, 0.0
        %vm1052 = vcmp.gt.f32.partialorder %v1036, 0.0
        %vm1053 = vcmp.gt.f32.partialorder %v1037, 0.0
        %vm1054 = vcmp.gt.f32.partialorder %v1038, 0.0
        %vm1055 = vcmp.gt.f32.partialorder %v1039, 0.0
        %vm1056 = vcmp.gt.f32.partialorder %v1040, 0.0
        %vm1057 = vcmp.gt.f32.partialorder %v1041, 0.0
        %vm1058 = vcmp.gt.f32.partialorder %v1042, 0.0
        %vm1059 = vcmp.gt.f32.partialorder %v1043, 0.0
        %vm1060 = vcmp.gt.f32.partialorder %v1044, 0.0
        %vm1061 = vcmp.gt.f32.partialorder %v1045, 0.0
        %vm1062 = vcmp.gt.f32.partialorder %v1046, 0.0
        %v1063 = vmul.f32 %v1031, 0.2
        %v1064 = vmul.f32 %v1032, 0.2
        %v1065 = vmul.f32 %v1033, 0.2
        %v1066 = vmul.f32 %v1034, 0.2
        %v1067 = vmul.f32 %v1035, 0.2
        %v1068 = vmul.f32 %v1036, 0.2
        %v1069 = vmul.f32 %v1037, 0.2
        %v1070 = vmul.f32 %v1038, 0.2
        %v1071 = vmul.f32 %v1039, 0.2
        %v1072 = vmul.f32 %v1040, 0.2
        %v1073 = vmul.f32 %v1041, 0.2
        %v1074 = vmul.f32 %v1042, 0.2
        %v1075 = vmul.f32 %v1043, 0.2
        %v1076 = vmul.f32 %v1044, 0.2
        %v1077 = vmul.f32 %v1045, 0.2
        %v1078 = vmul.f32 %v1046, 0.2
        %v1079 = vsel %vm1047, %v1031, %v1063
        %v1080 = vsel %vm1048, %v1032, %v1064
        %v1081 = vsel %vm1049, %v1033, %v1065
        %v1082 = vsel %vm1050, %v1034, %v1066
        %v1083 = vsel %vm1051, %v1035, %v1067
        %v1084 = vsel %vm1052, %v1036, %v1068
        %v1085 = vsel %vm1053, %v1037, %v1069
        %v1086 = vsel %vm1054, %v1038, %v1070
        %v1087 = vsel %vm1055, %v1039, %v1071
        %v1088 = vsel %vm1056, %v1040, %v1072
        %v1089 = vsel %vm1057, %v1041, %v1073
        %v1090 = vsel %vm1058, %v1042, %v1074
        %v1091 = vsel %vm1059, %v1043, %v1075
        %v1092 = vsel %vm1060, %v1044, %v1076
        %v1093 = vsel %vm1061, %v1045, %v1077
        %v1094 = vsel %vm1062, %v1046, %v1078
        %v1095 = vadd.f32 %v1079, %v225
        %v1096 = vadd.f32 %v1080, %v226
        %v1097 = vadd.f32 %v1081, %v227
        %v1098 = vadd.f32 %v1082, %v228
        %v1099 = vadd.f32 %v1083, %v229
        %v1100 = vadd.f32 %v1084, %v230
        %v1101 = vadd.f32 %v1085, %v231
        %v1102 = vadd.f32 %v1086, %v232
        %v1103 = vadd.f32 %v1087, %v233
        %v1104 = vadd.f32 %v1088, %v234
        %v1105 = vadd.f32 %v1089, %v235
        %v1106 = vadd.f32 %v1090, %v236
        %v1107 = vadd.f32 %v1091, %v237
        %v1108 = vadd.f32 %v1092, %v238
        %v1109 = vadd.f32 %v1093, %v239
        %v1110 = vadd.f32 %v1094, %v240
        %1111 = vmax.xlane.f32.xlu0 %v1095
        %v1112 = vpop.xlane.xlu0 %1111
        %1113 = vmax.xlane.f32.xlu0 %v1096
        %v1114 = vpop.xlane.xlu0 %1113
        %1115 = vmax.xlane.f32.xlu0 %v1097
        %v1116 = vpop.xlane.xlu0 %1115
        %1117 = vmax.xlane.f32.xlu0 %v1098
        %v1118 = vpop.xlane.xlu0 %1117
        %1119 = vmax.xlane.f32.xlu0 %v1099
        %v1120 = vpop.xlane.xlu0 %1119
        %1121 = vmax.xlane.f32.xlu0 %v1100
        %v1122 = vpop.xlane.xlu0 %1121
        %1123 = vmax.xlane.f32.xlu0 %v1101
        %v1124 = vpop.xlane.xlu0 %1123
        %1125 = vmax.xlane.f32.xlu0 %v1102
        %v1126 = vpop.xlane.xlu0 %1125
        %1127 = vmax.xlane.f32.xlu0 %v1103
        %v1128 = vpop.xlane.xlu0 %1127
        %1129 = vmax.xlane.f32.xlu0 %v1104
        %v1130 = vpop.xlane.xlu0 %1129
        %1131 = vmax.xlane.f32.xlu0 %v1105
        %v1132 = vpop.xlane.xlu0 %1131
        %1133 = vmax.xlane.f32.xlu0 %v1106
        %v1134 = vpop.xlane.xlu0 %1133
        %1135 = vmax.xlane.f32.xlu0 %v1107
        %v1136 = vpop.xlane.xlu0 %1135
        %1137 = vmax.xlane.f32.xlu0 %v1108
        %v1138 = vpop.xlane.xlu0 %1137
        %1139 = vmax.xlane.f32.xlu0 %v1109
        %v1140 = vpop.xlane.xlu0 %1139
        %1141 = vmax.xlane.f32.xlu0 %v1110
        %v1142 = vpop.xlane.xlu0 %1141
        %v1143 = vsub.f32 %v1095, %v1112
        %v1144 = vsub.f32 %v1096, %v1114
        %v1145 = vsub.f32 %v1097, %v1116
        %v1146 = vsub.f32 %v1098, %v1118
        %v1147 = vsub.f32 %v1099, %v1120
        %v1148 = vsub.f32 %v1100, %v1122
        %v1149 = vsub.f32 %v1101, %v1124
        %v1150 = vsub.f32 %v1102, %v1126
        %v1151 = vsub.f32 %v1103, %v1128
        %v1152 = vsub.f32 %v1104, %v1130
        %v1153 = vsub.f32 %v1105, %v1132
        %v1154 = vsub.f32 %v1106, %v1134
        %v1155 = vsub.f32 %v1107, %v1136
        %v1156 = vsub.f32 %v1108, %v1138
        %v1157 = vsub.f32 %v1109, %v1140
        %v1158 = vsub.f32 %v1110, %v1142
        %v1159 = vmul.f32 %v1143, 1.442695
        %v1160 = vpow.pop %v1159
        %v1161 = vmul.f32 %v1144, 1.442695
        %v1162 = vpow.pop %v1161
        %v1163 = vmul.f32 %v1145, 1.442695
        %v1164 = vpow.pop %v1163
        %v1165 = vmul.f32 %v1146, 1.442695
        %v1166 = vpow.pop %v1165
        %v1167 = vmul.f32 %v1147, 1.442695
        %v1168 = vpow.pop %v1167
        %v1169 = vmul.f32 %v1148, 1.442695
        %v1170 = vpow.pop %v1169
        %v1171 = vmul.f32 %v1149, 1.442695
        %v1172 = vpow.pop %v1171
        %v1173 = vmul.f32 %v1150, 1.442695
        %v1174 = vpow.pop %v1173
        %v1175 = vmul.f32 %v1151, 1.442695
        %v1176 = vpow.pop %v1175
        %v1177 = vmul.f32 %v1152, 1.442695
        %v1178 = vpow.pop %v1177
        %v1179 = vmul.f32 %v1153, 1.442695
        %v1180 = vpow.pop %v1179
        %v1181 = vmul.f32 %v1154, 1.442695
        %v1182 = vpow.pop %v1181
        %v1183 = vmul.f32 %v1155, 1.442695
        %v1184 = vpow.pop %v1183
        %v1185 = vmul.f32 %v1156, 1.442695
        %v1186 = vpow.pop %v1185
        %v1187 = vmul.f32 %v1157, 1.442695
        %v1188 = vpow.pop %v1187
        %v1189 = vmul.f32 %v1158, 1.442695
        %v1190 = vpow.pop %v1189
        %1191 = vadd.xlane.f32.xlu0 %v1160
        %v1192 = vpop.xlane.xlu0 %1191
        %1193 = vadd.xlane.f32.xlu0 %v1162
        %v1194 = vpop.xlane.xlu0 %1193
        %1195 = vadd.xlane.f32.xlu0 %v1164
        %v1196 = vpop.xlane.xlu0 %1195
        %1197 = vadd.xlane.f32.xlu0 %v1166
        %v1198 = vpop.xlane.xlu0 %1197
        %1199 = vadd.xlane.f32.xlu0 %v1168
        %v1200 = vpop.xlane.xlu0 %1199
        %1201 = vadd.xlane.f32.xlu0 %v1170
        %v1202 = vpop.xlane.xlu0 %1201
        %1203 = vadd.xlane.f32.xlu0 %v1172
        %v1204 = vpop.xlane.xlu0 %1203
        %1205 = vadd.xlane.f32.xlu0 %v1174
        %v1206 = vpop.xlane.xlu0 %1205
        %1207 = vadd.xlane.f32.xlu0 %v1176
        %v1208 = vpop.xlane.xlu0 %1207
        %1209 = vadd.xlane.f32.xlu0 %v1178
        %v1210 = vpop.xlane.xlu0 %1209
        %1211 = vadd.xlane.f32.xlu0 %v1180
        %v1212 = vpop.xlane.xlu0 %1211
        %1213 = vadd.xlane.f32.xlu0 %v1182
        %v1214 = vpop.xlane.xlu0 %1213
        %1215 = vadd.xlane.f32.xlu0 %v1184
        %v1216 = vpop.xlane.xlu0 %1215
        %1217 = vadd.xlane.f32.xlu0 %v1186
        %v1218 = vpop.xlane.xlu0 %1217
        %1219 = vadd.xlane.f32.xlu0 %v1188
        %v1220 = vpop.xlane.xlu0 %1219
        %1221 = vadd.xlane.f32.xlu0 %v1190
        %v1222 = vpop.xlane.xlu0 %1221
        %v1223 = vrcp.pop %v1192
        %v1224 = vrcp.pop %v1194
        %v1225 = vrcp.pop %v1196
        %v1226 = vrcp.pop %v1198
        %v1227 = vrcp.pop %v1200
        %v1228 = vrcp.pop %v1202
        %v1229 = vrcp.pop %v1204
        %v1230 = vrcp.pop %v1206
        %v1231 = vrcp.pop %v1208
        %v1232 = vrcp.pop %v1210
        %v1233 = vrcp.pop %v1212
        %v1234 = vrcp.pop %v1214
        %v1235 = vrcp.pop %v1216
        %v1236 = vrcp.pop %v1218
        %v1237 = vrcp.pop %v1220
        %v1238 = vrcp.pop %v1222
        %v1239 = vmul.f32 %v1160, %v1223
        %v1240 = vmul.f32 %v1162, %v1224
        %v1241 = vmul.f32 %v1164, %v1225
        %v1242 = vmul.f32 %v1166, %v1226
        %v1243 = vmul.f32 %v1168, %v1227
        %v1244 = vmul.f32 %v1170, %v1228
        %v1245 = vmul.f32 %v1172, %v1229
        %v1246 = vmul.f32 %v1174, %v1230
        %v1247 = vmul.f32 %v1176, %v1231
        %v1248 = vmul.f32 %v1178, %v1232
        %v1249 = vmul.f32 %v1180, %v1233
        %v1250 = vmul.f32 %v1182, %v1234
        %v1251 = vmul.f32 %v1184, %v1235
        %v1252 = vmul.f32 %v1186, %v1236
        %v1253 = vmul.f32 %v1188, %v1237
        %v1254 = vmul.f32 %v1190, %v1238
        %1271 = vmatpush.msra.mxu0 %v975
        %1272 = vmatpush.msra.mxu0 %v973
        %1273 = vmatpush.msra.mxu0 %v971
        %1274 = vmatpush.msra.mxu0 %v969
        %1275 = vmatpush.msra.mxu0 %v967
        %1276 = vmatpush.msra.mxu0 %v965
        %1277 = vmatpush.msra.mxu0 %v963
        %1278 = vmatpush.msra.mxu0 %v961
        %1279 = vmatpush.msra.mxu0 %v959
        %1280 = vmatpush.msra.mxu0 %v957
        %1281 = vmatpush.msra.mxu0 %v955
        %1282 = vmatpush.msra.mxu0 %v953
        %1283 = vmatpush.msra.mxu0 %v951
        %1284 = vmatpush.msra.mxu0 %v949
        %1285 = vmatpush.msra.mxu0 %v947
        %1286 = vmatpush.msra.mxu0 %v945
        %1287 = vmatmul.f32.gmra.mxu0 %v1239
        %v1288 = vpop.f32.mrf.mxu0
        %v1289 = vadd.f32 0.0, %v1288
        %1290 = vmatmul.f32.gmra.mxu0 %v1240
        %v1291 = vpop.f32.mrf.mxu0
        %v1292 = vadd.f32 0.0, %v1291
        %1293 = vmatmul.f32.gmra.mxu0 %v1241
        %v1294 = vpop.f32.mrf.mxu0
        %v1295 = vadd.f32 0.0, %v1294
        %1296 = vmatmul.f32.gmra.mxu0 %v1242
        %v1297 = vpop.f32.mrf.mxu0
        %v1298 = vadd.f32 0.0, %v1297
        %1299 = vmatmul.f32.gmra.mxu0 %v1243
        %v1300 = vpop.f32.mrf.mxu0
        %v1301 = vadd.f32 0.0, %v1300
        %1302 = vmatmul.f32.gmra.mxu0 %v1244
        %v1303 = vpop.f32.mrf.mxu0
        %v1304 = vadd.f32 0.0, %v1303
        %1305 = vmatmul.f32.gmra.mxu0 %v1245
        %v1306 = vpop.f32.mrf.mxu0
        %v1307 = vadd.f32 0.0, %v1306
        %1308 = vmatmul.f32.gmra.mxu0 %v1246
        %v1309 = vpop.f32.mrf.mxu0
        %v1310 = vadd.f32 0.0, %v1309
        %1311 = vmatmul.f32.gmra.mxu0 %v1247
        %v1312 = vpop.f32.mrf.mxu0
        %v1313 = vadd.f32 0.0, %v1312
        %1314 = vmatmul.f32.gmra.mxu0 %v1248
        %v1315 = vpop.f32.mrf.mxu0
        %v1316 = vadd.f32 0.0, %v1315
        %1317 = vmatmul.f32.gmra.mxu0 %v1249
        %v1318 = vpop.f32.mrf.mxu0
        %v1319 = vadd.f32 0.0, %v1318
        %1320 = vmatmul.f32.gmra.mxu0 %v1250
        %v1321 = vpop.f32.mrf.mxu0
        %v1322 = vadd.f32 0.0, %v1321
        %1323 = vmatmul.f32.gmra.mxu0 %v1251
        %v1324 = vpop.f32.mrf.mxu0
        %v1325 = vadd.f32 0.0, %v1324
        %1326 = vmatmul.f32.gmra.mxu0 %v1252
        %v1327 = vpop.f32.mrf.mxu0
        %v1328 = vadd.f32 0.0, %v1327
        %1329 = vmatmul.f32.gmra.mxu0 %v1253
        %v1330 = vpop.f32.mrf.mxu0
        %v1331 = vadd.f32 0.0, %v1330
        %1332 = vmatmul.f32.gmra.mxu0 %v1254
        %v1333 = vpop.f32.mrf.mxu0
        %v1334 = vadd.f32 0.0, %v1333
        %1335 = vdwg.mxu0
        %1352 = vrot.lane.b32.xlu0 %v1289, 32
        %v1353 = vpop.permute.xlu0 %1352
        %1354 = vrot.lane.b32.xlu0 %v1292, 32
        %v1355 = vpop.permute.xlu0 %1354
        %1356 = vrot.lane.b32.xlu0 %v1295, 32
        %v1357 = vpop.permute.xlu0 %1356
        %1358 = vrot.lane.b32.xlu0 %v1298, 32
        %v1359 = vpop.permute.xlu0 %1358
        %1360 = vrot.lane.b32.xlu0 %v1301, 32
        %v1361 = vpop.permute.xlu0 %1360
        %1362 = vrot.lane.b32.xlu0 %v1304, 32
        %v1363 = vpop.permute.xlu0 %1362
        %1364 = vrot.lane.b32.xlu0 %v1307, 32
        %v1365 = vpop.permute.xlu0 %1364
        %1366 = vrot.lane.b32.xlu0 %v1310, 32
        %v1367 = vpop.permute.xlu0 %1366
        %1368 = vrot.lane.b32.xlu0 %v1313, 32
        %v1369 = vpop.permute.xlu0 %1368
        %1370 = vrot.lane.b32.xlu0 %v1316, 32
        %v1371 = vpop.permute.xlu0 %1370
        %1372 = vrot.lane.b32.xlu0 %v1319, 32
        %v1373 = vpop.permute.xlu0 %1372
        %1374 = vrot.lane.b32.xlu0 %v1322, 32
        %v1375 = vpop.permute.xlu0 %1374
        %1376 = vrot.lane.b32.xlu0 %v1325, 32
        %v1377 = vpop.permute.xlu0 %1376
        %1378 = vrot.lane.b32.xlu0 %v1328, 32
        %v1379 = vpop.permute.xlu0 %1378
        %1380 = vrot.lane.b32.xlu0 %v1331, 32
        %v1381 = vpop.permute.xlu0 %1380
        %1382 = vrot.lane.b32.xlu0 %v1334, 32
        %v1383 = vpop.permute.xlu0 %1382
        %v1400 = vsel %vm400, %v763, %v1353
        %v1401 = vsel %vm400, %v766, %v1355
        %v1402 = vsel %vm400, %v769, %v1357
        %v1403 = vsel %vm400, %v772, %v1359
        %v1404 = vsel %vm400, %v775, %v1361
        %v1405 = vsel %vm400, %v778, %v1363
        %v1406 = vsel %vm400, %v781, %v1365
        %v1407 = vsel %vm400, %v784, %v1367
        %v1408 = vsel %vm400, %v787, %v1369
        %v1409 = vsel %vm400, %v790, %v1371
        %v1410 = vsel %vm400, %v793, %v1373
        %v1411 = vsel %vm400, %v796, %v1375
        %v1412 = vsel %vm400, %v799, %v1377
        %v1413 = vsel %vm400, %v802, %v1379
        %v1414 = vsel %vm400, %v805, %v1381
        %v1415 = vsel %vm400, %v808, %v1383
        %v1416 = vperm.slane %v263, 0
        %v1417 = vadd.f32 %v1400, %v1416
        %v1418 = vadd.f32 %v1401, %v1416
        %v1419 = vadd.f32 %v1402, %v1416
        %v1420 = vadd.f32 %v1403, %v1416
        %v1421 = vadd.f32 %v1404, %v1416
        %v1422 = vadd.f32 %v1405, %v1416
        %v1423 = vadd.f32 %v1406, %v1416
        %v1424 = vadd.f32 %v1407, %v1416
        %v1425 = vadd.f32 %v1408, %v1416
        %v1426 = vadd.f32 %v1409, %v1416
        %v1427 = vadd.f32 %v1410, %v1416
        %v1428 = vadd.f32 %v1411, %v1416
        %v1429 = vadd.f32 %v1412, %v1416
        %v1430 = vadd.f32 %v1413, %v1416
        %v1431 = vadd.f32 %v1414, %v1416
        %v1432 = vadd.f32 %v1415, %v1416
        %v1433 = vmax.f32 %v1417, 0.0
        %v1434 = vmax.f32 %v1418, 0.0
        %v1435 = vmax.f32 %v1419, 0.0
        %v1436 = vmax.f32 %v1420, 0.0
        %v1437 = vmax.f32 %v1421, 0.0
        %v1438 = vmax.f32 %v1422, 0.0
        %v1439 = vmax.f32 %v1423, 0.0
        %v1440 = vmax.f32 %v1424, 0.0
        %v1441 = vmax.f32 %v1425, 0.0
        %v1442 = vmax.f32 %v1426, 0.0
        %v1443 = vmax.f32 %v1427, 0.0
        %v1444 = vmax.f32 %v1428, 0.0
        %v1445 = vmax.f32 %v1429, 0.0
        %v1446 = vmax.f32 %v1430, 0.0
        %v1447 = vmax.f32 %v1431, 0.0
        %v1448 = vmax.f32 %v1432, 0.0
        %vm1449 = vcmask 523264
        %v1451 = vsel %vm1449, %v1433, 0
        %v1454 = vsel %vm1449, %v1434, 0
        %v1457 = vsel %vm1449, %v1435, 0
        %v1460 = vsel %vm1449, %v1436, 0
        %v1463 = vsel %vm1449, %v1437, 0
        %v1466 = vsel %vm1449, %v1438, 0
        %v1469 = vsel %vm1449, %v1439, 0
        %v1472 = vsel %vm1449, %v1440, 0
        %v1475 = vsel %vm1449, %v1441, 0
        %v1478 = vsel %vm1449, %v1442, 0
        %v1481 = vsel %vm1449, %v1443, 0
        %v1484 = vsel %vm1449, %v1444, 0
        %v1487 = vsel %vm1449, %v1445, 0
        %v1490 = vsel %vm1449, %v1446, 0
        %v1493 = vsel %vm1449, %v1447, 0
        %v1496 = vsel %vm1449, %v1448, 0
        %1498 = vmatpush.msra.mxu0 0.0
        %1499 = vmatpush.msra.mxu0 0.0
        %1500 = vmatpush.msra.mxu0 0.0
        %1501 = vmatpush.msra.mxu0 0.0
        %1502 = vmatpush.msra.mxu0 0.0
        %1503 = vmatpush.msra.mxu0 0.0
        %1504 = vmatpush.msra.mxu0 0.0
        %1505 = vmatpush.msra.mxu0 0.0
        %1506 = vmatpush.msra.mxu0 %v250
        %1507 = vmatpush.msra.mxu0 %v249
        %1508 = vmatpush.msra.mxu0 %v248
        %1509 = vmatpush.msra.mxu0 %v247
        %1510 = vmatpush.msra.mxu0 %v246
        %1511 = vmatpush.msra.mxu0 %v245
        %1512 = vmatpush.msra.mxu0 %v244
        %1513 = vmatpush.msra.mxu0 %v243
        %1514 = vmatmul.f32.gmra.mxu0 %v1451
        %v1515 = vpop.f32.mrf.mxu0
        %v1516 = vadd.f32 0.0, %v1515
        %1517 = vmatmul.f32.gmra.mxu0 %v1454
        %v1518 = vpop.f32.mrf.mxu0
        %v1519 = vadd.f32 0.0, %v1518
        %1520 = vmatmul.f32.gmra.mxu0 %v1457
        %v1521 = vpop.f32.mrf.mxu0
        %v1522 = vadd.f32 0.0, %v1521
        %1523 = vmatmul.f32.gmra.mxu0 %v1460
        %v1524 = vpop.f32.mrf.mxu0
        %v1525 = vadd.f32 0.0, %v1524
        %1526 = vmatmul.f32.gmra.mxu0 %v1463
        %v1527 = vpop.f32.mrf.mxu0
        %v1528 = vadd.f32 0.0, %v1527
        %1529 = vmatmul.f32.gmra.mxu0 %v1466
        %v1530 = vpop.f32.mrf.mxu0
        %v1531 = vadd.f32 0.0, %v1530
        %1532 = vmatmul.f32.gmra.mxu0 %v1469
        %v1533 = vpop.f32.mrf.mxu0
        %v1534 = vadd.f32 0.0, %v1533
        %1535 = vmatmul.f32.gmra.mxu0 %v1472
        %v1536 = vpop.f32.mrf.mxu0
        %v1537 = vadd.f32 0.0, %v1536
        %1538 = vmatmul.f32.gmra.mxu0 %v1475
        %v1539 = vpop.f32.mrf.mxu0
        %v1540 = vadd.f32 0.0, %v1539
        %1541 = vmatmul.f32.gmra.mxu0 %v1478
        %v1542 = vpop.f32.mrf.mxu0
        %v1543 = vadd.f32 0.0, %v1542
        %1544 = vmatmul.f32.gmra.mxu0 %v1481
        %v1545 = vpop.f32.mrf.mxu0
        %v1546 = vadd.f32 0.0, %v1545
        %1547 = vmatmul.f32.gmra.mxu0 %v1484
        %v1548 = vpop.f32.mrf.mxu0
        %v1549 = vadd.f32 0.0, %v1548
        %1550 = vmatmul.f32.gmra.mxu0 %v1487
        %v1551 = vpop.f32.mrf.mxu0
        %v1552 = vadd.f32 0.0, %v1551
        %1553 = vmatmul.f32.gmra.mxu0 %v1490
        %v1554 = vpop.f32.mrf.mxu0
        %v1555 = vadd.f32 0.0, %v1554
        %1556 = vmatmul.f32.gmra.mxu0 %v1493
        %v1557 = vpop.f32.mrf.mxu0
        %v1558 = vadd.f32 0.0, %v1557
        %1559 = vmatmul.f32.gmra.mxu0 %v1496
        %v1560 = vpop.f32.mrf.mxu0
        %v1561 = vadd.f32 0.0, %v1560
        %1562 = vdwg.mxu0
        %v1563 = vperm.slane %v262, 0
        %v1564 = vmul.f32 %v1516, %v1563
        %v1565 = vmul.f32 %v1519, %v1563
        %v1566 = vmul.f32 %v1522, %v1563
        %v1567 = vmul.f32 %v1525, %v1563
        %v1568 = vmul.f32 %v1528, %v1563
        %v1569 = vmul.f32 %v1531, %v1563
        %v1570 = vmul.f32 %v1534, %v1563
        %v1571 = vmul.f32 %v1537, %v1563
        %v1572 = vmul.f32 %v1540, %v1563
        %v1573 = vmul.f32 %v1543, %v1563
        %v1574 = vmul.f32 %v1546, %v1563
        %v1575 = vmul.f32 %v1549, %v1563
        %v1576 = vmul.f32 %v1552, %v1563
        %v1577 = vmul.f32 %v1555, %v1563
        %v1578 = vmul.f32 %v1558, %v1563
        %v1579 = vmul.f32 %v1561, %v1563
        %v1580 = vsel %vm269, %v1564, 0.0
        %1581 = vadd.xlane.f32.xlu0 %v1580
        %v1582 = vpop.xlane.xlu0 %1581
        %v1583 = vsel %vm269, %v1565, 0.0
        %1584 = vadd.xlane.f32.xlu0 %v1583
        %v1585 = vpop.xlane.xlu0 %1584
        %v1586 = vsel %vm269, %v1566, 0.0
        %1587 = vadd.xlane.f32.xlu0 %v1586
        %v1588 = vpop.xlane.xlu0 %1587
        %v1589 = vsel %vm269, %v1567, 0.0
        %1590 = vadd.xlane.f32.xlu0 %v1589
        %v1591 = vpop.xlane.xlu0 %1590
        %v1592 = vsel %vm269, %v1568, 0.0
        %1593 = vadd.xlane.f32.xlu0 %v1592
        %v1594 = vpop.xlane.xlu0 %1593
        %v1595 = vsel %vm269, %v1569, 0.0
        %1596 = vadd.xlane.f32.xlu0 %v1595
        %v1597 = vpop.xlane.xlu0 %1596
        %v1598 = vsel %vm269, %v1570, 0.0
        %1599 = vadd.xlane.f32.xlu0 %v1598
        %v1600 = vpop.xlane.xlu0 %1599
        %v1601 = vsel %vm269, %v1571, 0.0
        %1602 = vadd.xlane.f32.xlu0 %v1601
        %v1603 = vpop.xlane.xlu0 %1602
        %v1604 = vsel %vm269, %v1572, 0.0
        %1605 = vadd.xlane.f32.xlu0 %v1604
        %v1606 = vpop.xlane.xlu0 %1605
        %v1607 = vsel %vm269, %v1573, 0.0
        %1608 = vadd.xlane.f32.xlu0 %v1607
        %v1609 = vpop.xlane.xlu0 %1608
        %v1610 = vsel %vm269, %v1574, 0.0
        %1611 = vadd.xlane.f32.xlu0 %v1610
        %v1612 = vpop.xlane.xlu0 %1611
        %v1613 = vsel %vm269, %v1575, 0.0
        %1614 = vadd.xlane.f32.xlu0 %v1613
        %v1615 = vpop.xlane.xlu0 %1614
        %v1616 = vsel %vm269, %v1576, 0.0
        %1617 = vadd.xlane.f32.xlu0 %v1616
        %v1618 = vpop.xlane.xlu0 %1617
        %v1619 = vsel %vm269, %v1577, 0.0
        %1620 = vadd.xlane.f32.xlu0 %v1619
        %v1621 = vpop.xlane.xlu0 %1620
        %v1622 = vsel %vm269, %v1578, 0.0
        %1623 = vadd.xlane.f32.xlu0 %v1622
        %v1624 = vpop.xlane.xlu0 %1623
        %v1625 = vsel %vm269, %v1579, 0.0
        %1626 = vadd.xlane.f32.xlu0 %v1625
        %v1627 = vpop.xlane.xlu0 %1626
        %v1629 = vsel %vm269, %v261, 0
        %v1632 = vsel %vm269, %v1516, 0
        %v1635 = vsel %vm269, %v1519, 0
        %v1638 = vsel %vm269, %v1522, 0
        %v1641 = vsel %vm269, %v1525, 0
        %v1644 = vsel %vm269, %v1528, 0
        %v1647 = vsel %vm269, %v1531, 0
        %v1650 = vsel %vm269, %v1534, 0
        %v1653 = vsel %vm269, %v1537, 0
        %v1656 = vsel %vm269, %v1540, 0
        %v1659 = vsel %vm269, %v1543, 0
        %v1662 = vsel %vm269, %v1546, 0
        %v1665 = vsel %vm269, %v1549, 0
        %v1668 = vsel %vm269, %v1552, 0
        %v1671 = vsel %vm269, %v1555, 0
        %v1674 = vsel %vm269, %v1558, 0
        %v1677 = vsel %vm269, %v1561, 0
        %1679 = vmatpush.xpose.msra.mxu0 %v1677
        %1680 = vmatpush.xpose.msra.mxu0 %v1674
        %1681 = vmatpush.xpose.msra.mxu0 %v1671
        %1682 = vmatpush.xpose.msra.mxu0 %v1668
        %1683 = vmatpush.xpose.msra.mxu0 %v1665
        %1684 = vmatpush.xpose.msra.mxu0 %v1662
        %1685 = vmatpush.xpose.msra.mxu0 %v1659
        %1686 = vmatpush.xpose.msra.mxu0 %v1656
        %1687 = vmatpush.xpose.msra.mxu0 %v1653
        %1688 = vmatpush.xpose.msra.mxu0 %v1650
        %1689 = vmatpush.xpose.msra.mxu0 %v1647
        %1690 = vmatpush.xpose.msra.mxu0 %v1644
        %1691 = vmatpush.xpose.msra.mxu0 %v1641
        %1692 = vmatpush.xpose.msra.mxu0 %v1638
        %1693 = vmatpush.xpose.msra.mxu0 %v1635
        %1694 = vmatpush.xpose.msra.mxu0 %v1632
        %1695 = vmatmul.f32.gmra.mxu0 %v1629
        %v1696 = vpop.f32.mrf.mxu0
        %v1697 = vadd.f32 0.0, %v1696
        %1698 = vdwg.mxu0
        %v1699 = vperm.slane %v1697, 0
        %v1700 = vadd.f32 %v1582, %v1699
        %v1701 = vadd.f32 %v1585, %v1699
        %v1702 = vadd.f32 %v1588, %v1699
        %v1703 = vadd.f32 %v1591, %v1699
        %v1704 = vadd.f32 %v1594, %v1699
        %v1705 = vadd.f32 %v1597, %v1699
        %v1706 = vadd.f32 %v1600, %v1699
        %v1707 = vadd.f32 %v1603, %v1699
        %v1708 = vadd.f32 %v1606, %v1699
        %v1709 = vadd.f32 %v1609, %v1699
        %v1710 = vadd.f32 %v1612, %v1699
        %v1711 = vadd.f32 %v1615, %v1699
        %v1712 = vadd.f32 %v1618, %v1699
        %v1713 = vadd.f32 %v1621, %v1699
        %v1714 = vadd.f32 %v1624, %v1699
        %v1715 = vadd.f32 %v1627, %v1699
        %vm1716 = vcmp.gt.f32.partialorder %v1700, 0.0
        %vm1717 = vcmp.gt.f32.partialorder %v1701, 0.0
        %vm1718 = vcmp.gt.f32.partialorder %v1702, 0.0
        %vm1719 = vcmp.gt.f32.partialorder %v1703, 0.0
        %vm1720 = vcmp.gt.f32.partialorder %v1704, 0.0
        %vm1721 = vcmp.gt.f32.partialorder %v1705, 0.0
        %vm1722 = vcmp.gt.f32.partialorder %v1706, 0.0
        %vm1723 = vcmp.gt.f32.partialorder %v1707, 0.0
        %vm1724 = vcmp.gt.f32.partialorder %v1708, 0.0
        %vm1725 = vcmp.gt.f32.partialorder %v1709, 0.0
        %vm1726 = vcmp.gt.f32.partialorder %v1710, 0.0
        %vm1727 = vcmp.gt.f32.partialorder %v1711, 0.0
        %vm1728 = vcmp.gt.f32.partialorder %v1712, 0.0
        %vm1729 = vcmp.gt.f32.partialorder %v1713, 0.0
        %vm1730 = vcmp.gt.f32.partialorder %v1714, 0.0
        %vm1731 = vcmp.gt.f32.partialorder %v1715, 0.0
        %v1732 = vmul.f32 %v1700, 0.2
        %v1733 = vmul.f32 %v1701, 0.2
        %v1734 = vmul.f32 %v1702, 0.2
        %v1735 = vmul.f32 %v1703, 0.2
        %v1736 = vmul.f32 %v1704, 0.2
        %v1737 = vmul.f32 %v1705, 0.2
        %v1738 = vmul.f32 %v1706, 0.2
        %v1739 = vmul.f32 %v1707, 0.2
        %v1740 = vmul.f32 %v1708, 0.2
        %v1741 = vmul.f32 %v1709, 0.2
        %v1742 = vmul.f32 %v1710, 0.2
        %v1743 = vmul.f32 %v1711, 0.2
        %v1744 = vmul.f32 %v1712, 0.2
        %v1745 = vmul.f32 %v1713, 0.2
        %v1746 = vmul.f32 %v1714, 0.2
        %v1747 = vmul.f32 %v1715, 0.2
        %v1748 = vsel %vm1716, %v1700, %v1732
        %v1749 = vsel %vm1717, %v1701, %v1733
        %v1750 = vsel %vm1718, %v1702, %v1734
        %v1751 = vsel %vm1719, %v1703, %v1735
        %v1752 = vsel %vm1720, %v1704, %v1736
        %v1753 = vsel %vm1721, %v1705, %v1737
        %v1754 = vsel %vm1722, %v1706, %v1738
        %v1755 = vsel %vm1723, %v1707, %v1739
        %v1756 = vsel %vm1724, %v1708, %v1740
        %v1757 = vsel %vm1725, %v1709, %v1741
        %v1758 = vsel %vm1726, %v1710, %v1742
        %v1759 = vsel %vm1727, %v1711, %v1743
        %v1760 = vsel %vm1728, %v1712, %v1744
        %v1761 = vsel %vm1729, %v1713, %v1745
        %v1762 = vsel %vm1730, %v1714, %v1746
        %v1763 = vsel %vm1731, %v1715, %v1747
        %v1764 = vadd.f32 %v1748, %v225
        %v1765 = vadd.f32 %v1749, %v226
        %v1766 = vadd.f32 %v1750, %v227
        %v1767 = vadd.f32 %v1751, %v228
        %v1768 = vadd.f32 %v1752, %v229
        %v1769 = vadd.f32 %v1753, %v230
        %v1770 = vadd.f32 %v1754, %v231
        %v1771 = vadd.f32 %v1755, %v232
        %v1772 = vadd.f32 %v1756, %v233
        %v1773 = vadd.f32 %v1757, %v234
        %v1774 = vadd.f32 %v1758, %v235
        %v1775 = vadd.f32 %v1759, %v236
        %v1776 = vadd.f32 %v1760, %v237
        %v1777 = vadd.f32 %v1761, %v238
        %v1778 = vadd.f32 %v1762, %v239
        %v1779 = vadd.f32 %v1763, %v240
        %1780 = vmax.xlane.f32.xlu0 %v1764
        %v1781 = vpop.xlane.xlu0 %1780
        %1782 = vmax.xlane.f32.xlu0 %v1765
        %v1783 = vpop.xlane.xlu0 %1782
        %1784 = vmax.xlane.f32.xlu0 %v1766
        %v1785 = vpop.xlane.xlu0 %1784
        %1786 = vmax.xlane.f32.xlu0 %v1767
        %v1787 = vpop.xlane.xlu0 %1786
        %1788 = vmax.xlane.f32.xlu0 %v1768
        %v1789 = vpop.xlane.xlu0 %1788
        %1790 = vmax.xlane.f32.xlu0 %v1769
        %v1791 = vpop.xlane.xlu0 %1790
        %1792 = vmax.xlane.f32.xlu0 %v1770
        %v1793 = vpop.xlane.xlu0 %1792
        %1794 = vmax.xlane.f32.xlu0 %v1771
        %v1795 = vpop.xlane.xlu0 %1794
        %1796 = vmax.xlane.f32.xlu0 %v1772
        %v1797 = vpop.xlane.xlu0 %1796
        %1798 = vmax.xlane.f32.xlu0 %v1773
        %v1799 = vpop.xlane.xlu0 %1798
        %1800 = vmax.xlane.f32.xlu0 %v1774
        %v1801 = vpop.xlane.xlu0 %1800
        %1802 = vmax.xlane.f32.xlu0 %v1775
        %v1803 = vpop.xlane.xlu0 %1802
        %1804 = vmax.xlane.f32.xlu0 %v1776
        %v1805 = vpop.xlane.xlu0 %1804
        %1806 = vmax.xlane.f32.xlu0 %v1777
        %v1807 = vpop.xlane.xlu0 %1806
        %1808 = vmax.xlane.f32.xlu0 %v1778
        %v1809 = vpop.xlane.xlu0 %1808
        %1810 = vmax.xlane.f32.xlu0 %v1779
        %v1811 = vpop.xlane.xlu0 %1810
        %v1812 = vsub.f32 %v1764, %v1781
        %v1813 = vsub.f32 %v1765, %v1783
        %v1814 = vsub.f32 %v1766, %v1785
        %v1815 = vsub.f32 %v1767, %v1787
        %v1816 = vsub.f32 %v1768, %v1789
        %v1817 = vsub.f32 %v1769, %v1791
        %v1818 = vsub.f32 %v1770, %v1793
        %v1819 = vsub.f32 %v1771, %v1795
        %v1820 = vsub.f32 %v1772, %v1797
        %v1821 = vsub.f32 %v1773, %v1799
        %v1822 = vsub.f32 %v1774, %v1801
        %v1823 = vsub.f32 %v1775, %v1803
        %v1824 = vsub.f32 %v1776, %v1805
        %v1825 = vsub.f32 %v1777, %v1807
        %v1826 = vsub.f32 %v1778, %v1809
        %v1827 = vsub.f32 %v1779, %v1811
        %v1828 = vmul.f32 %v1812, 1.442695
        %v1829 = vpow.pop %v1828
        %v1830 = vmul.f32 %v1813, 1.442695
        %v1831 = vpow.pop %v1830
        %v1832 = vmul.f32 %v1814, 1.442695
        %v1833 = vpow.pop %v1832
        %v1834 = vmul.f32 %v1815, 1.442695
        %v1835 = vpow.pop %v1834
        %v1836 = vmul.f32 %v1816, 1.442695
        %v1837 = vpow.pop %v1836
        %v1838 = vmul.f32 %v1817, 1.442695
        %v1839 = vpow.pop %v1838
        %v1840 = vmul.f32 %v1818, 1.442695
        %v1841 = vpow.pop %v1840
        %v1842 = vmul.f32 %v1819, 1.442695
        %v1843 = vpow.pop %v1842
        %v1844 = vmul.f32 %v1820, 1.442695
        %v1845 = vpow.pop %v1844
        %v1846 = vmul.f32 %v1821, 1.442695
        %v1847 = vpow.pop %v1846
        %v1848 = vmul.f32 %v1822, 1.442695
        %v1849 = vpow.pop %v1848
        %v1850 = vmul.f32 %v1823, 1.442695
        %v1851 = vpow.pop %v1850
        %v1852 = vmul.f32 %v1824, 1.442695
        %v1853 = vpow.pop %v1852
        %v1854 = vmul.f32 %v1825, 1.442695
        %v1855 = vpow.pop %v1854
        %v1856 = vmul.f32 %v1826, 1.442695
        %v1857 = vpow.pop %v1856
        %v1858 = vmul.f32 %v1827, 1.442695
        %v1859 = vpow.pop %v1858
        %1860 = vadd.xlane.f32.xlu0 %v1829
        %v1861 = vpop.xlane.xlu0 %1860
        %1862 = vadd.xlane.f32.xlu0 %v1831
        %v1863 = vpop.xlane.xlu0 %1862
        %1864 = vadd.xlane.f32.xlu0 %v1833
        %v1865 = vpop.xlane.xlu0 %1864
        %1866 = vadd.xlane.f32.xlu0 %v1835
        %v1867 = vpop.xlane.xlu0 %1866
        %1868 = vadd.xlane.f32.xlu0 %v1837
        %v1869 = vpop.xlane.xlu0 %1868
        %1870 = vadd.xlane.f32.xlu0 %v1839
        %v1871 = vpop.xlane.xlu0 %1870
        %1872 = vadd.xlane.f32.xlu0 %v1841
        %v1873 = vpop.xlane.xlu0 %1872
        %1874 = vadd.xlane.f32.xlu0 %v1843
        %v1875 = vpop.xlane.xlu0 %1874
        %1876 = vadd.xlane.f32.xlu0 %v1845
        %v1877 = vpop.xlane.xlu0 %1876
        %1878 = vadd.xlane.f32.xlu0 %v1847
        %v1879 = vpop.xlane.xlu0 %1878
        %1880 = vadd.xlane.f32.xlu0 %v1849
        %v1881 = vpop.xlane.xlu0 %1880
        %1882 = vadd.xlane.f32.xlu0 %v1851
        %v1883 = vpop.xlane.xlu0 %1882
        %1884 = vadd.xlane.f32.xlu0 %v1853
        %v1885 = vpop.xlane.xlu0 %1884
        %1886 = vadd.xlane.f32.xlu0 %v1855
        %v1887 = vpop.xlane.xlu0 %1886
        %1888 = vadd.xlane.f32.xlu0 %v1857
        %v1889 = vpop.xlane.xlu0 %1888
        %1890 = vadd.xlane.f32.xlu0 %v1859
        %v1891 = vpop.xlane.xlu0 %1890
        %v1892 = vrcp.pop %v1861
        %v1893 = vrcp.pop %v1863
        %v1894 = vrcp.pop %v1865
        %v1895 = vrcp.pop %v1867
        %v1896 = vrcp.pop %v1869
        %v1897 = vrcp.pop %v1871
        %v1898 = vrcp.pop %v1873
        %v1899 = vrcp.pop %v1875
        %v1900 = vrcp.pop %v1877
        %v1901 = vrcp.pop %v1879
        %v1902 = vrcp.pop %v1881
        %v1903 = vrcp.pop %v1883
        %v1904 = vrcp.pop %v1885
        %v1905 = vrcp.pop %v1887
        %v1906 = vrcp.pop %v1889
        %v1907 = vrcp.pop %v1891
        %v1908 = vmul.f32 %v1829, %v1892
        %v1909 = vmul.f32 %v1831, %v1893
        %v1910 = vmul.f32 %v1833, %v1894
        %v1911 = vmul.f32 %v1835, %v1895
        %v1912 = vmul.f32 %v1837, %v1896
        %v1913 = vmul.f32 %v1839, %v1897
        %v1914 = vmul.f32 %v1841, %v1898
        %v1915 = vmul.f32 %v1843, %v1899
        %v1916 = vmul.f32 %v1845, %v1900
        %v1917 = vmul.f32 %v1847, %v1901
        %v1918 = vmul.f32 %v1849, %v1902
        %v1919 = vmul.f32 %v1851, %v1903
        %v1920 = vmul.f32 %v1853, %v1904
        %v1921 = vmul.f32 %v1855, %v1905
        %v1922 = vmul.f32 %v1857, %v1906
        %v1923 = vmul.f32 %v1859, %v1907
        %1924 = vmatpush.msra.mxu0 %v1561
        %1925 = vmatpush.msra.mxu0 %v1558
        %1926 = vmatpush.msra.mxu0 %v1555
        %1927 = vmatpush.msra.mxu0 %v1552
        %1928 = vmatpush.msra.mxu0 %v1549
        %1929 = vmatpush.msra.mxu0 %v1546
        %1930 = vmatpush.msra.mxu0 %v1543
        %1931 = vmatpush.msra.mxu0 %v1540
        %1932 = vmatpush.msra.mxu0 %v1537
        %1933 = vmatpush.msra.mxu0 %v1534
        %1934 = vmatpush.msra.mxu0 %v1531
        %1935 = vmatpush.msra.mxu0 %v1528
        %1936 = vmatpush.msra.mxu0 %v1525
        %1937 = vmatpush.msra.mxu0 %v1522
        %1938 = vmatpush.msra.mxu0 %v1519
        %1939 = vmatpush.msra.mxu0 %v1516
        %1940 = vmatmul.f32.gmra.mxu0 %v1908
        %v1941 = vpop.f32.mrf.mxu0
        %v1942 = vadd.f32 0.0, %v1941
        %1943 = vmatmul.f32.gmra.mxu0 %v1909
        %v1944 = vpop.f32.mrf.mxu0
        %v1945 = vadd.f32 0.0, %v1944
        %1946 = vmatmul.f32.gmra.mxu0 %v1910
        %v1947 = vpop.f32.mrf.mxu0
        %v1948 = vadd.f32 0.0, %v1947
        %1949 = vmatmul.f32.gmra.mxu0 %v1911
        %v1950 = vpop.f32.mrf.mxu0
        %v1951 = vadd.f32 0.0, %v1950
        %1952 = vmatmul.f32.gmra.mxu0 %v1912
        %v1953 = vpop.f32.mrf.mxu0
        %v1954 = vadd.f32 0.0, %v1953
        %1955 = vmatmul.f32.gmra.mxu0 %v1913
        %v1956 = vpop.f32.mrf.mxu0
        %v1957 = vadd.f32 0.0, %v1956
        %1958 = vmatmul.f32.gmra.mxu0 %v1914
        %v1959 = vpop.f32.mrf.mxu0
        %v1960 = vadd.f32 0.0, %v1959
        %1961 = vmatmul.f32.gmra.mxu0 %v1915
        %v1962 = vpop.f32.mrf.mxu0
        %v1963 = vadd.f32 0.0, %v1962
        %1964 = vmatmul.f32.gmra.mxu0 %v1916
        %v1965 = vpop.f32.mrf.mxu0
        %v1966 = vadd.f32 0.0, %v1965
        %1967 = vmatmul.f32.gmra.mxu0 %v1917
        %v1968 = vpop.f32.mrf.mxu0
        %v1969 = vadd.f32 0.0, %v1968
        %1970 = vmatmul.f32.gmra.mxu0 %v1918
        %v1971 = vpop.f32.mrf.mxu0
        %v1972 = vadd.f32 0.0, %v1971
        %1973 = vmatmul.f32.gmra.mxu0 %v1919
        %v1974 = vpop.f32.mrf.mxu0
        %v1975 = vadd.f32 0.0, %v1974
        %1976 = vmatmul.f32.gmra.mxu0 %v1920
        %v1977 = vpop.f32.mrf.mxu0
        %v1978 = vadd.f32 0.0, %v1977
        %1979 = vmatmul.f32.gmra.mxu0 %v1921
        %v1980 = vpop.f32.mrf.mxu0
        %v1981 = vadd.f32 0.0, %v1980
        %1982 = vmatmul.f32.gmra.mxu0 %v1922
        %v1983 = vpop.f32.mrf.mxu0
        %v1984 = vadd.f32 0.0, %v1983
        %1985 = vmatmul.f32.gmra.mxu0 %v1923
        %v1986 = vpop.f32.mrf.mxu0
        %v1987 = vadd.f32 0.0, %v1986
        %1988 = vdwg.mxu0
        %v1989 = vperm.slane %v262, 1
        %1991 = vrot.lane.b32.xlu0 %v1989, 16
        %v1992 = vpop.permute.xlu0 %1991
        %v1994 = vmul.f32 %v1516, %v1992
        %v1995 = vmul.f32 %v1519, %v1992
        %v1996 = vmul.f32 %v1522, %v1992
        %v1997 = vmul.f32 %v1525, %v1992
        %v1998 = vmul.f32 %v1528, %v1992
        %v1999 = vmul.f32 %v1531, %v1992
        %v2000 = vmul.f32 %v1534, %v1992
        %v2001 = vmul.f32 %v1537, %v1992
        %v2002 = vmul.f32 %v1540, %v1992
        %v2003 = vmul.f32 %v1543, %v1992
        %v2004 = vmul.f32 %v1546, %v1992
        %v2005 = vmul.f32 %v1549, %v1992
        %v2006 = vmul.f32 %v1552, %v1992
        %v2007 = vmul.f32 %v1555, %v1992
        %v2008 = vmul.f32 %v1558, %v1992
        %v2009 = vmul.f32 %v1561, %v1992
        %2026 = vrot.lane.b32.xlu0 %v1994, 112
        %v2027 = vpop.permute.xlu0 %2026
        %2028 = vrot.lane.b32.xlu0 %v1995, 112
        %v2029 = vpop.permute.xlu0 %2028
        %2030 = vrot.lane.b32.xlu0 %v1996, 112
        %v2031 = vpop.permute.xlu0 %2030
        %2032 = vrot.lane.b32.xlu0 %v1997, 112
        %v2033 = vpop.permute.xlu0 %2032
        %2034 = vrot.lane.b32.xlu0 %v1998, 112
        %v2035 = vpop.permute.xlu0 %2034
        %2036 = vrot.lane.b32.xlu0 %v1999, 112
        %v2037 = vpop.permute.xlu0 %2036
        %2038 = vrot.lane.b32.xlu0 %v2000, 112
        %v2039 = vpop.permute.xlu0 %2038
        %2040 = vrot.lane.b32.xlu0 %v2001, 112
        %v2041 = vpop.permute.xlu0 %2040
        %2042 = vrot.lane.b32.xlu0 %v2002, 112
        %v2043 = vpop.permute.xlu0 %2042
        %2044 = vrot.lane.b32.xlu0 %v2003, 112
        %v2045 = vpop.permute.xlu0 %2044
        %2046 = vrot.lane.b32.xlu0 %v2004, 112
        %v2047 = vpop.permute.xlu0 %2046
        %2048 = vrot.lane.b32.xlu0 %v2005, 112
        %v2049 = vpop.permute.xlu0 %2048
        %2050 = vrot.lane.b32.xlu0 %v2006, 112
        %v2051 = vpop.permute.xlu0 %2050
        %2052 = vrot.lane.b32.xlu0 %v2007, 112
        %v2053 = vpop.permute.xlu0 %2052
        %2054 = vrot.lane.b32.xlu0 %v2008, 112
        %v2055 = vpop.permute.xlu0 %2054
        %2056 = vrot.lane.b32.xlu0 %v2009, 112
        %v2057 = vpop.permute.xlu0 %2056
        %v2074 = vsel %vm269, %v2027, 0.0
        %2075 = vadd.xlane.f32.xlu0 %v2074
        %v2076 = vpop.xlane.xlu0 %2075
        %v2077 = vsel %vm269, %v2029, 0.0
        %2078 = vadd.xlane.f32.xlu0 %v2077
        %v2079 = vpop.xlane.xlu0 %2078
        %v2080 = vsel %vm269, %v2031, 0.0
        %2081 = vadd.xlane.f32.xlu0 %v2080
        %v2082 = vpop.xlane.xlu0 %2081
        %v2083 = vsel %vm269, %v2033, 0.0
        %2084 = vadd.xlane.f32.xlu0 %v2083
        %v2085 = vpop.xlane.xlu0 %2084
        %v2086 = vsel %vm269, %v2035, 0.0
        %2087 = vadd.xlane.f32.xlu0 %v2086
        %v2088 = vpop.xlane.xlu0 %2087
        %v2089 = vsel %vm269, %v2037, 0.0
        %2090 = vadd.xlane.f32.xlu0 %v2089
        %v2091 = vpop.xlane.xlu0 %2090
        %v2092 = vsel %vm269, %v2039, 0.0
        %2093 = vadd.xlane.f32.xlu0 %v2092
        %v2094 = vpop.xlane.xlu0 %2093
        %v2095 = vsel %vm269, %v2041, 0.0
        %2096 = vadd.xlane.f32.xlu0 %v2095
        %v2097 = vpop.xlane.xlu0 %2096
        %v2098 = vsel %vm269, %v2043, 0.0
        %2099 = vadd.xlane.f32.xlu0 %v2098
        %v2100 = vpop.xlane.xlu0 %2099
        %v2101 = vsel %vm269, %v2045, 0.0
        %2102 = vadd.xlane.f32.xlu0 %v2101
        %v2103 = vpop.xlane.xlu0 %2102
        %v2104 = vsel %vm269, %v2047, 0.0
        %2105 = vadd.xlane.f32.xlu0 %v2104
        %v2106 = vpop.xlane.xlu0 %2105
        %v2107 = vsel %vm269, %v2049, 0.0
        %2108 = vadd.xlane.f32.xlu0 %v2107
        %v2109 = vpop.xlane.xlu0 %2108
        %v2110 = vsel %vm269, %v2051, 0.0
        %2111 = vadd.xlane.f32.xlu0 %v2110
        %v2112 = vpop.xlane.xlu0 %2111
        %v2113 = vsel %vm269, %v2053, 0.0
        %2114 = vadd.xlane.f32.xlu0 %v2113
        %v2115 = vpop.xlane.xlu0 %2114
        %v2116 = vsel %vm269, %v2055, 0.0
        %2117 = vadd.xlane.f32.xlu0 %v2116
        %v2118 = vpop.xlane.xlu0 %2117
        %v2119 = vsel %vm269, %v2057, 0.0
        %2120 = vadd.xlane.f32.xlu0 %v2119
        %v2121 = vpop.xlane.xlu0 %2120
        %v2122 = vrot.slane %v261, 1
        %2123 = vrot.lane.b32.xlu0 %v1516, 112
        %v2124 = vpop.permute.xlu0 %2123
        %2125 = vrot.lane.b32.xlu0 %v1519, 112
        %v2126 = vpop.permute.xlu0 %2125
        %2127 = vrot.lane.b32.xlu0 %v1522, 112
        %v2128 = vpop.permute.xlu0 %2127
        %2129 = vrot.lane.b32.xlu0 %v1525, 112
        %v2130 = vpop.permute.xlu0 %2129
        %2131 = vrot.lane.b32.xlu0 %v1528, 112
        %v2132 = vpop.permute.xlu0 %2131
        %2133 = vrot.lane.b32.xlu0 %v1531, 112
        %v2134 = vpop.permute.xlu0 %2133
        %2135 = vrot.lane.b32.xlu0 %v1534, 112
        %v2136 = vpop.permute.xlu0 %2135
        %2137 = vrot.lane.b32.xlu0 %v1537, 112
        %v2138 = vpop.permute.xlu0 %2137
        %2139 = vrot.lane.b32.xlu0 %v1540, 112
        %v2140 = vpop.permute.xlu0 %2139
        %2141 = vrot.lane.b32.xlu0 %v1543, 112
        %v2142 = vpop.permute.xlu0 %2141
        %2143 = vrot.lane.b32.xlu0 %v1546, 112
        %v2144 = vpop.permute.xlu0 %2143
        %2145 = vrot.lane.b32.xlu0 %v1549, 112
        %v2146 = vpop.permute.xlu0 %2145
        %2147 = vrot.lane.b32.xlu0 %v1552, 112
        %v2148 = vpop.permute.xlu0 %2147
        %2149 = vrot.lane.b32.xlu0 %v1555, 112
        %v2150 = vpop.permute.xlu0 %2149
        %2151 = vrot.lane.b32.xlu0 %v1558, 112
        %v2152 = vpop.permute.xlu0 %2151
        %2153 = vrot.lane.b32.xlu0 %v1561, 112
        %v2154 = vpop.permute.xlu0 %2153
        %v2155 = vsel %vm269, %v2122, 0
        %v2157 = vsel %vm269, %v2124, 0
        %v2159 = vsel %vm269, %v2126, 0
        %v2161 = vsel %vm269, %v2128, 0
        %v2163 = vsel %vm269, %v2130, 0
        %v2165 = vsel %vm269, %v2132, 0
        %v2167 = vsel %vm269, %v2134, 0
        %v2169 = vsel %vm269, %v2136, 0
        %v2171 = vsel %vm269, %v2138, 0
        %v2173 = vsel %vm269, %v2140, 0
        %v2175 = vsel %vm269, %v2142, 0
        %v2177 = vsel %vm269, %v2144, 0
        %v2179 = vsel %vm269, %v2146, 0
        %v2181 = vsel %vm269, %v2148, 0
        %v2183 = vsel %vm269, %v2150, 0
        %v2185 = vsel %vm269, %v2152, 0
        %v2187 = vsel %vm269, %v2154, 0
        %2189 = vmatpush.xpose.msra.mxu0 %v2187
        %2190 = vmatpush.xpose.msra.mxu0 %v2185
        %2191 = vmatpush.xpose.msra.mxu0 %v2183
        %2192 = vmatpush.xpose.msra.mxu0 %v2181
        %2193 = vmatpush.xpose.msra.mxu0 %v2179
        %2194 = vmatpush.xpose.msra.mxu0 %v2177
        %2195 = vmatpush.xpose.msra.mxu0 %v2175
        %2196 = vmatpush.xpose.msra.mxu0 %v2173
        %2197 = vmatpush.xpose.msra.mxu0 %v2171
        %2198 = vmatpush.xpose.msra.mxu0 %v2169
        %2199 = vmatpush.xpose.msra.mxu0 %v2167
        %2200 = vmatpush.xpose.msra.mxu0 %v2165
        %2201 = vmatpush.xpose.msra.mxu0 %v2163
        %2202 = vmatpush.xpose.msra.mxu0 %v2161
        %2203 = vmatpush.xpose.msra.mxu0 %v2159
        %2204 = vmatpush.xpose.msra.mxu0 %v2157
        %2205 = vmatmul.f32.gmra.mxu0 %v2155
        %v2206 = vpop.f32.mrf.mxu0
        %v2207 = vadd.f32 0.0, %v2206
        %2208 = vdwg.mxu0
        %v2209 = vperm.slane %v2207, 0
        %v2210 = vadd.f32 %v2076, %v2209
        %v2211 = vadd.f32 %v2079, %v2209
        %v2212 = vadd.f32 %v2082, %v2209
        %v2213 = vadd.f32 %v2085, %v2209
        %v2214 = vadd.f32 %v2088, %v2209
        %v2215 = vadd.f32 %v2091, %v2209
        %v2216 = vadd.f32 %v2094, %v2209
        %v2217 = vadd.f32 %v2097, %v2209
        %v2218 = vadd.f32 %v2100, %v2209
        %v2219 = vadd.f32 %v2103, %v2209
        %v2220 = vadd.f32 %v2106, %v2209
        %v2221 = vadd.f32 %v2109, %v2209
        %v2222 = vadd.f32 %v2112, %v2209
        %v2223 = vadd.f32 %v2115, %v2209
        %v2224 = vadd.f32 %v2118, %v2209
        %v2225 = vadd.f32 %v2121, %v2209
        %vm2226 = vcmp.gt.f32.partialorder %v2210, 0.0
        %vm2227 = vcmp.gt.f32.partialorder %v2211, 0.0
        %vm2228 = vcmp.gt.f32.partialorder %v2212, 0.0
        %vm2229 = vcmp.gt.f32.partialorder %v2213, 0.0
        %vm2230 = vcmp.gt.f32.partialorder %v2214, 0.0
        %vm2231 = vcmp.gt.f32.partialorder %v2215, 0.0
        %vm2232 = vcmp.gt.f32.partialorder %v2216, 0.0
        %vm2233 = vcmp.gt.f32.partialorder %v2217, 0.0
        %vm2234 = vcmp.gt.f32.partialorder %v2218, 0.0
        %vm2235 = vcmp.gt.f32.partialorder %v2219, 0.0
        %vm2236 = vcmp.gt.f32.partialorder %v2220, 0.0
        %vm2237 = vcmp.gt.f32.partialorder %v2221, 0.0
        %vm2238 = vcmp.gt.f32.partialorder %v2222, 0.0
        %vm2239 = vcmp.gt.f32.partialorder %v2223, 0.0
        %vm2240 = vcmp.gt.f32.partialorder %v2224, 0.0
        %vm2241 = vcmp.gt.f32.partialorder %v2225, 0.0
        %v2242 = vmul.f32 %v2210, 0.2
        %v2243 = vmul.f32 %v2211, 0.2
        %v2244 = vmul.f32 %v2212, 0.2
        %v2245 = vmul.f32 %v2213, 0.2
        %v2246 = vmul.f32 %v2214, 0.2
        %v2247 = vmul.f32 %v2215, 0.2
        %v2248 = vmul.f32 %v2216, 0.2
        %v2249 = vmul.f32 %v2217, 0.2
        %v2250 = vmul.f32 %v2218, 0.2
        %v2251 = vmul.f32 %v2219, 0.2
        %v2252 = vmul.f32 %v2220, 0.2
        %v2253 = vmul.f32 %v2221, 0.2
        %v2254 = vmul.f32 %v2222, 0.2
        %v2255 = vmul.f32 %v2223, 0.2
        %v2256 = vmul.f32 %v2224, 0.2
        %v2257 = vmul.f32 %v2225, 0.2
        %v2258 = vsel %vm2226, %v2210, %v2242
        %v2259 = vsel %vm2227, %v2211, %v2243
        %v2260 = vsel %vm2228, %v2212, %v2244
        %v2261 = vsel %vm2229, %v2213, %v2245
        %v2262 = vsel %vm2230, %v2214, %v2246
        %v2263 = vsel %vm2231, %v2215, %v2247
        %v2264 = vsel %vm2232, %v2216, %v2248
        %v2265 = vsel %vm2233, %v2217, %v2249
        %v2266 = vsel %vm2234, %v2218, %v2250
        %v2267 = vsel %vm2235, %v2219, %v2251
        %v2268 = vsel %vm2236, %v2220, %v2252
        %v2269 = vsel %vm2237, %v2221, %v2253
        %v2270 = vsel %vm2238, %v2222, %v2254
        %v2271 = vsel %vm2239, %v2223, %v2255
        %v2272 = vsel %vm2240, %v2224, %v2256
        %v2273 = vsel %vm2241, %v2225, %v2257
        %v2274 = vadd.f32 %v2258, %v225
        %v2275 = vadd.f32 %v2259, %v226
        %v2276 = vadd.f32 %v2260, %v227
        %v2277 = vadd.f32 %v2261, %v228
        %v2278 = vadd.f32 %v2262, %v229
        %v2279 = vadd.f32 %v2263, %v230
        %v2280 = vadd.f32 %v2264, %v231
        %v2281 = vadd.f32 %v2265, %v232
        %v2282 = vadd.f32 %v2266, %v233
        %v2283 = vadd.f32 %v2267, %v234
        %v2284 = vadd.f32 %v2268, %v235
        %v2285 = vadd.f32 %v2269, %v236
        %v2286 = vadd.f32 %v2270, %v237
        %v2287 = vadd.f32 %v2271, %v238
        %v2288 = vadd.f32 %v2272, %v239
        %v2289 = vadd.f32 %v2273, %v240
        %2290 = vmax.xlane.f32.xlu0 %v2274
        %v2291 = vpop.xlane.xlu0 %2290
        %2292 = vmax.xlane.f32.xlu0 %v2275
        %v2293 = vpop.xlane.xlu0 %2292
        %2294 = vmax.xlane.f32.xlu0 %v2276
        %v2295 = vpop.xlane.xlu0 %2294
        %2296 = vmax.xlane.f32.xlu0 %v2277
        %v2297 = vpop.xlane.xlu0 %2296
        %2298 = vmax.xlane.f32.xlu0 %v2278
        %v2299 = vpop.xlane.xlu0 %2298
        %2300 = vmax.xlane.f32.xlu0 %v2279
        %v2301 = vpop.xlane.xlu0 %2300
        %2302 = vmax.xlane.f32.xlu0 %v2280
        %v2303 = vpop.xlane.xlu0 %2302
        %2304 = vmax.xlane.f32.xlu0 %v2281
        %v2305 = vpop.xlane.xlu0 %2304
        %2306 = vmax.xlane.f32.xlu0 %v2282
        %v2307 = vpop.xlane.xlu0 %2306
        %2308 = vmax.xlane.f32.xlu0 %v2283
        %v2309 = vpop.xlane.xlu0 %2308
        %2310 = vmax.xlane.f32.xlu0 %v2284
        %v2311 = vpop.xlane.xlu0 %2310
        %2312 = vmax.xlane.f32.xlu0 %v2285
        %v2313 = vpop.xlane.xlu0 %2312
        %2314 = vmax.xlane.f32.xlu0 %v2286
        %v2315 = vpop.xlane.xlu0 %2314
        %2316 = vmax.xlane.f32.xlu0 %v2287
        %v2317 = vpop.xlane.xlu0 %2316
        %2318 = vmax.xlane.f32.xlu0 %v2288
        %v2319 = vpop.xlane.xlu0 %2318
        %2320 = vmax.xlane.f32.xlu0 %v2289
        %v2321 = vpop.xlane.xlu0 %2320
        %v2322 = vsub.f32 %v2274, %v2291
        %v2323 = vsub.f32 %v2275, %v2293
        %v2324 = vsub.f32 %v2276, %v2295
        %v2325 = vsub.f32 %v2277, %v2297
        %v2326 = vsub.f32 %v2278, %v2299
        %v2327 = vsub.f32 %v2279, %v2301
        %v2328 = vsub.f32 %v2280, %v2303
        %v2329 = vsub.f32 %v2281, %v2305
        %v2330 = vsub.f32 %v2282, %v2307
        %v2331 = vsub.f32 %v2283, %v2309
        %v2332 = vsub.f32 %v2284, %v2311
        %v2333 = vsub.f32 %v2285, %v2313
        %v2334 = vsub.f32 %v2286, %v2315
        %v2335 = vsub.f32 %v2287, %v2317
        %v2336 = vsub.f32 %v2288, %v2319
        %v2337 = vsub.f32 %v2289, %v2321
        %v2338 = vmul.f32 %v2322, 1.442695
        %v2339 = vpow.pop %v2338
        %v2340 = vmul.f32 %v2323, 1.442695
        %v2341 = vpow.pop %v2340
        %v2342 = vmul.f32 %v2324, 1.442695
        %v2343 = vpow.pop %v2342
        %v2344 = vmul.f32 %v2325, 1.442695
        %v2345 = vpow.pop %v2344
        %v2346 = vmul.f32 %v2326, 1.442695
        %v2347 = vpow.pop %v2346
        %v2348 = vmul.f32 %v2327, 1.442695
        %v2349 = vpow.pop %v2348
        %v2350 = vmul.f32 %v2328, 1.442695
        %v2351 = vpow.pop %v2350
        %v2352 = vmul.f32 %v2329, 1.442695
        %v2353 = vpow.pop %v2352
        %v2354 = vmul.f32 %v2330, 1.442695
        %v2355 = vpow.pop %v2354
        %v2356 = vmul.f32 %v2331, 1.442695
        %v2357 = vpow.pop %v2356
        %v2358 = vmul.f32 %v2332, 1.442695
        %v2359 = vpow.pop %v2358
        %v2360 = vmul.f32 %v2333, 1.442695
        %v2361 = vpow.pop %v2360
        %v2362 = vmul.f32 %v2334, 1.442695
        %v2363 = vpow.pop %v2362
        %v2364 = vmul.f32 %v2335, 1.442695
        %v2365 = vpow.pop %v2364
        %v2366 = vmul.f32 %v2336, 1.442695
        %v2367 = vpow.pop %v2366
        %v2368 = vmul.f32 %v2337, 1.442695
        %v2369 = vpow.pop %v2368
        %2370 = vadd.xlane.f32.xlu0 %v2339
        %v2371 = vpop.xlane.xlu0 %2370
        %2372 = vadd.xlane.f32.xlu0 %v2341
        %v2373 = vpop.xlane.xlu0 %2372
        %2374 = vadd.xlane.f32.xlu0 %v2343
        %v2375 = vpop.xlane.xlu0 %2374
        %2376 = vadd.xlane.f32.xlu0 %v2345
        %v2377 = vpop.xlane.xlu0 %2376
        %2378 = vadd.xlane.f32.xlu0 %v2347
        %v2379 = vpop.xlane.xlu0 %2378
        %2380 = vadd.xlane.f32.xlu0 %v2349
        %v2381 = vpop.xlane.xlu0 %2380
        %2382 = vadd.xlane.f32.xlu0 %v2351
        %v2383 = vpop.xlane.xlu0 %2382
        %2384 = vadd.xlane.f32.xlu0 %v2353
        %v2385 = vpop.xlane.xlu0 %2384
        %2386 = vadd.xlane.f32.xlu0 %v2355
        %v2387 = vpop.xlane.xlu0 %2386
        %2388 = vadd.xlane.f32.xlu0 %v2357
        %v2389 = vpop.xlane.xlu0 %2388
        %2390 = vadd.xlane.f32.xlu0 %v2359
        %v2391 = vpop.xlane.xlu0 %2390
        %2392 = vadd.xlane.f32.xlu0 %v2361
        %v2393 = vpop.xlane.xlu0 %2392
        %2394 = vadd.xlane.f32.xlu0 %v2363
        %v2395 = vpop.xlane.xlu0 %2394
        %2396 = vadd.xlane.f32.xlu0 %v2365
        %v2397 = vpop.xlane.xlu0 %2396
        %2398 = vadd.xlane.f32.xlu0 %v2367
        %v2399 = vpop.xlane.xlu0 %2398
        %2400 = vadd.xlane.f32.xlu0 %v2369
        %v2401 = vpop.xlane.xlu0 %2400
        %v2402 = vrcp.pop %v2371
        %v2403 = vrcp.pop %v2373
        %v2404 = vrcp.pop %v2375
        %v2405 = vrcp.pop %v2377
        %v2406 = vrcp.pop %v2379
        %v2407 = vrcp.pop %v2381
        %v2408 = vrcp.pop %v2383
        %v2409 = vrcp.pop %v2385
        %v2410 = vrcp.pop %v2387
        %v2411 = vrcp.pop %v2389
        %v2412 = vrcp.pop %v2391
        %v2413 = vrcp.pop %v2393
        %v2414 = vrcp.pop %v2395
        %v2415 = vrcp.pop %v2397
        %v2416 = vrcp.pop %v2399
        %v2417 = vrcp.pop %v2401
        %v2418 = vmul.f32 %v2339, %v2402
        %v2419 = vmul.f32 %v2341, %v2403
        %v2420 = vmul.f32 %v2343, %v2404
        %v2421 = vmul.f32 %v2345, %v2405
        %v2422 = vmul.f32 %v2347, %v2406
        %v2423 = vmul.f32 %v2349, %v2407
        %v2424 = vmul.f32 %v2351, %v2408
        %v2425 = vmul.f32 %v2353, %v2409
        %v2426 = vmul.f32 %v2355, %v2410
        %v2427 = vmul.f32 %v2357, %v2411
        %v2428 = vmul.f32 %v2359, %v2412
        %v2429 = vmul.f32 %v2361, %v2413
        %v2430 = vmul.f32 %v2363, %v2414
        %v2431 = vmul.f32 %v2365, %v2415
        %v2432 = vmul.f32 %v2367, %v2416
        %v2433 = vmul.f32 %v2369, %v2417
        %2450 = vmatpush.msra.mxu0 %v2154
        %2451 = vmatpush.msra.mxu0 %v2152
        %2452 = vmatpush.msra.mxu0 %v2150
        %2453 = vmatpush.msra.mxu0 %v2148
        %2454 = vmatpush.msra.mxu0 %v2146
        %2455 = vmatpush.msra.mxu0 %v2144
        %2456 = vmatpush.msra.mxu0 %v2142
        %2457 = vmatpush.msra.mxu0 %v2140
        %2458 = vmatpush.msra.mxu0 %v2138
        %2459 = vmatpush.msra.mxu0 %v2136
        %2460 = vmatpush.msra.mxu0 %v2134
        %2461 = vmatpush.msra.mxu0 %v2132
        %2462 = vmatpush.msra.mxu0 %v2130
        %2463 = vmatpush.msra.mxu0 %v2128
        %2464 = vmatpush.msra.mxu0 %v2126
        %2465 = vmatpush.msra.mxu0 %v2124
        %2466 = vmatmul.f32.gmra.mxu0 %v2418
        %v2467 = vpop.f32.mrf.mxu0
        %v2468 = vadd.f32 0.0, %v2467
        %2469 = vmatmul.f32.gmra.mxu0 %v2419
        %v2470 = vpop.f32.mrf.mxu0
        %v2471 = vadd.f32 0.0, %v2470
        %2472 = vmatmul.f32.gmra.mxu0 %v2420
        %v2473 = vpop.f32.mrf.mxu0
        %v2474 = vadd.f32 0.0, %v2473
        %2475 = vmatmul.f32.gmra.mxu0 %v2421
        %v2476 = vpop.f32.mrf.mxu0
        %v2477 = vadd.f32 0.0, %v2476
        %2478 = vmatmul.f32.gmra.mxu0 %v2422
        %v2479 = vpop.f32.mrf.mxu0
        %v2480 = vadd.f32 0.0, %v2479
        %2481 = vmatmul.f32.gmra.mxu0 %v2423
        %v2482 = vpop.f32.mrf.mxu0
        %v2483 = vadd.f32 0.0, %v2482
        %2484 = vmatmul.f32.gmra.mxu0 %v2424
        %v2485 = vpop.f32.mrf.mxu0
        %v2486 = vadd.f32 0.0, %v2485
        %2487 = vmatmul.f32.gmra.mxu0 %v2425
        %v2488 = vpop.f32.mrf.mxu0
        %v2489 = vadd.f32 0.0, %v2488
        %2490 = vmatmul.f32.gmra.mxu0 %v2426
        %v2491 = vpop.f32.mrf.mxu0
        %v2492 = vadd.f32 0.0, %v2491
        %2493 = vmatmul.f32.gmra.mxu0 %v2427
        %v2494 = vpop.f32.mrf.mxu0
        %v2495 = vadd.f32 0.0, %v2494
        %2496 = vmatmul.f32.gmra.mxu0 %v2428
        %v2497 = vpop.f32.mrf.mxu0
        %v2498 = vadd.f32 0.0, %v2497
        %2499 = vmatmul.f32.gmra.mxu0 %v2429
        %v2500 = vpop.f32.mrf.mxu0
        %v2501 = vadd.f32 0.0, %v2500
        %2502 = vmatmul.f32.gmra.mxu0 %v2430
        %v2503 = vpop.f32.mrf.mxu0
        %v2504 = vadd.f32 0.0, %v2503
        %2505 = vmatmul.f32.gmra.mxu0 %v2431
        %v2506 = vpop.f32.mrf.mxu0
        %v2507 = vadd.f32 0.0, %v2506
        %2508 = vmatmul.f32.gmra.mxu0 %v2432
        %v2509 = vpop.f32.mrf.mxu0
        %v2510 = vadd.f32 0.0, %v2509
        %2511 = vmatmul.f32.gmra.mxu0 %v2433
        %v2512 = vpop.f32.mrf.mxu0
        %v2513 = vadd.f32 0.0, %v2512
        %2514 = vdwg.mxu0
        %2531 = vrot.lane.b32.xlu0 %v2468, 16
        %v2532 = vpop.permute.xlu0 %2531
        %2533 = vrot.lane.b32.xlu0 %v2471, 16
        %v2534 = vpop.permute.xlu0 %2533
        %2535 = vrot.lane.b32.xlu0 %v2474, 16
        %v2536 = vpop.permute.xlu0 %2535
        %2537 = vrot.lane.b32.xlu0 %v2477, 16
        %v2538 = vpop.permute.xlu0 %2537
        %2539 = vrot.lane.b32.xlu0 %v2480, 16
        %v2540 = vpop.permute.xlu0 %2539
        %2541 = vrot.lane.b32.xlu0 %v2483, 16
        %v2542 = vpop.permute.xlu0 %2541
        %2543 = vrot.lane.b32.xlu0 %v2486, 16
        %v2544 = vpop.permute.xlu0 %2543
        %2545 = vrot.lane.b32.xlu0 %v2489, 16
        %v2546 = vpop.permute.xlu0 %2545
        %2547 = vrot.lane.b32.xlu0 %v2492, 16
        %v2548 = vpop.permute.xlu0 %2547
        %2549 = vrot.lane.b32.xlu0 %v2495, 16
        %v2550 = vpop.permute.xlu0 %2549
        %2551 = vrot.lane.b32.xlu0 %v2498, 16
        %v2552 = vpop.permute.xlu0 %2551
        %2553 = vrot.lane.b32.xlu0 %v2501, 16
        %v2554 = vpop.permute.xlu0 %2553
        %2555 = vrot.lane.b32.xlu0 %v2504, 16
        %v2556 = vpop.permute.xlu0 %2555
        %2557 = vrot.lane.b32.xlu0 %v2507, 16
        %v2558 = vpop.permute.xlu0 %2557
        %2559 = vrot.lane.b32.xlu0 %v2510, 16
        %v2560 = vpop.permute.xlu0 %2559
        %2561 = vrot.lane.b32.xlu0 %v2513, 16
        %v2562 = vpop.permute.xlu0 %2561
        %v2579 = vsel %vm269, %v1942, %v2532
        %v2580 = vsel %vm269, %v1945, %v2534
        %v2581 = vsel %vm269, %v1948, %v2536
        %v2582 = vsel %vm269, %v1951, %v2538
        %v2583 = vsel %vm269, %v1954, %v2540
        %v2584 = vsel %vm269, %v1957, %v2542
        %v2585 = vsel %vm269, %v1960, %v2544
        %v2586 = vsel %vm269, %v1963, %v2546
        %v2587 = vsel %vm269, %v1966, %v2548
        %v2588 = vsel %vm269, %v1969, %v2550
        %v2589 = vsel %vm269, %v1972, %v2552
        %v2590 = vsel %vm269, %v1975, %v2554
        %v2591 = vsel %vm269, %v1978, %v2556
        %v2592 = vsel %vm269, %v1981, %v2558
        %v2593 = vsel %vm269, %v1984, %v2560
        %v2594 = vsel %vm269, %v1987, %v2562
        %v2595 = vperm.slane %v264, 0
        %v2596 = vadd.f32 %v2579, %v2595
        %v2597 = vadd.f32 %v2580, %v2595
        %v2598 = vadd.f32 %v2581, %v2595
        %v2599 = vadd.f32 %v2582, %v2595
        %v2600 = vadd.f32 %v2583, %v2595
        %v2601 = vadd.f32 %v2584, %v2595
        %v2602 = vadd.f32 %v2585, %v2595
        %v2603 = vadd.f32 %v2586, %v2595
        %v2604 = vadd.f32 %v2587, %v2595
        %v2605 = vadd.f32 %v2588, %v2595
        %v2606 = vadd.f32 %v2589, %v2595
        %v2607 = vadd.f32 %v2590, %v2595
        %v2608 = vadd.f32 %v2591, %v2595
        %v2609 = vadd.f32 %v2592, %v2595
        %v2610 = vadd.f32 %v2593, %v2595
        %v2611 = vadd.f32 %v2594, %v2595
        %2612 = vmatpush.msra.mxu0 %v2611
        %2613 = vmatpush.msra.mxu0 %v2610
        %2614 = vmatpush.msra.mxu0 %v2609
        %2615 = vmatpush.msra.mxu0 %v2608
        %2616 = vmatpush.msra.mxu0 %v2607
        %2617 = vmatpush.msra.mxu0 %v2606
        %2618 = vmatpush.msra.mxu0 %v2605
        %2619 = vmatpush.msra.mxu0 %v2604
        %2620 = vmatpush.msra.mxu0 %v2603
        %2621 = vmatpush.msra.mxu0 %v2602
        %2622 = vmatpush.msra.mxu0 %v2601
        %2623 = vmatpush.msra.mxu0 %v2600
        %2624 = vmatpush.msra.mxu0 %v2599
        %2625 = vmatpush.msra.mxu0 %v2598
        %2626 = vmatpush.msra.mxu0 %v2597
        %2627 = vmatpush.msra.mxu0 %v2596
        %2628 = vmatmul.f32.gmra.mxu0 %v267
        %v2629 = vpop.f32.mrf.mxu0
        %v2630 = vadd.f32 0.0, %v2629
        %2631 = vmatmul.f32.gmra.mxu0 %v268
        %v2632 = vpop.f32.mrf.mxu0
        %v2633 = vadd.f32 0.0, %v2632
        %2634 = vdwg.mxu0
        %v2635 = vperm.slane %v265, 0
        %v2637 = vsel %vm400, %v2630, 0
        %v2640 = vsel %vm400, %v2633, 0
        %2642 = vmatpush.msra.mxu0 0.0
        %2643 = vmatpush.msra.mxu0 0.0
        %2644 = vmatpush.msra.mxu0 0.0
        %2645 = vmatpush.msra.mxu0 0.0
        %2646 = vmatpush.msra.mxu0 0.0
        %2647 = vmatpush.msra.mxu0 0.0
        %2648 = vmatpush.msra.mxu0 0.0
        %2649 = vmatpush.msra.mxu0 0.0
        %2650 = vmatpush.msra.mxu0 0.0
        %2651 = vmatpush.msra.mxu0 0.0
        %2652 = vmatpush.msra.mxu0 0.0
        %2653 = vmatpush.msra.mxu0 0.0
        %2654 = vmatpush.msra.mxu0 %v254
        %2655 = vmatpush.msra.mxu0 %v253
        %2656 = vmatpush.msra.mxu0 %v252
        %2657 = vmatpush.msra.mxu0 %v251
        %2658 = vmatmul.f32.gmra.mxu0 %v2637
        %v2659 = vpop.f32.mrf.mxu0
        %v2660 = vadd.f32 %v2635, %v2659
        %2661 = vmatmul.f32.gmra.mxu0 %v2640
        %v2662 = vpop.f32.mrf.mxu0
        %v2663 = vadd.f32 %v2635, %v2662
        %2664 = vdwg.mxu0
        %v2665 = vperm.slane %v266, 0
        %v2667 = vsel %vm400, %v2660, 0
        %v2670 = vsel %vm400, %v2663, 0
        %2672 = vmatpush.msra.mxu0 0.0
        %2673 = vmatpush.msra.mxu0 0.0
        %2674 = vmatpush.msra.mxu0 0.0
        %2675 = vmatpush.msra.mxu0 0.0
        %2676 = vmatpush.msra.mxu0 0.0
        %2677 = vmatpush.msra.mxu0 0.0
        %2678 = vmatpush.msra.mxu0 0.0
        %2679 = vmatpush.msra.mxu0 0.0
        %2680 = vmatpush.msra.mxu0 0.0
        %2681 = vmatpush.msra.mxu0 0.0
        %2682 = vmatpush.msra.mxu0 0.0
        %2683 = vmatpush.msra.mxu0 0.0
        %2684 = vmatpush.msra.mxu0 %v258
        %2685 = vmatpush.msra.mxu0 %v257
        %2686 = vmatpush.msra.mxu0 %v256
        %2687 = vmatpush.msra.mxu0 %v255
        %2688 = vmatmul.f32.gmra.mxu0 %v2667
        %v2689 = vpop.f32.mrf.mxu0
        %v2690 = vadd.f32 %v2665, %v2689
        %2691 = vmatmul.f32.gmra.mxu0 %v2670
        %v2692 = vpop.f32.mrf.mxu0
        %v2693 = vadd.f32 %v2665, %v2692
        %2694 = vdwg.mxu0
        %2695 = vst [vmem:[%s196] sm:$0xff] %v2690
        %2696 = vst [vmem:[%s196 + $0x8] sm:$0xff] %v2693
        %s2697 = sand.u32 %s99, 1
        %s2698 = scalar_lea.sflag [#allocation4], %s2697
        %s2699 = sand.u32 %s99, 1
        %s2700 = smul.addr %s2699, 16
        %s2701 = scalar_lea.vmem [#allocation5], %s2700
        // Predicated region
        $region37: #{tpu_custom_call.1} parent=31 // pred_check
          %p2702 = pneg %p109
        $region38: #{tpu_custom_call.1} parent=31 // pred_check_branch
          %2704 = sbr.rel (%p2702) target = $region40
        $region39: #{tpu_custom_call.1} parent=31 // pred_region
          %s2705 = smul.u32 2, %s18
          %2707 = vsyncadd %s2698, 0
          %s2708 = smul.addr %s2705, 8
          %s2709 = scalar_lea.hbm %s3, %s2708
          %s2710 = sshll.u32 %s2701, 4
          %s2711 = int_to_ptr.vmem [resolvable:$true] %s2710
          %s2712 = sshll.u32 %s2709, 4
          %s2713 = int_to_ptr.hbm [resolvable:$true] %s2712
          %2718 = dma.vmem_to_hbm [thread:$0]  %s2711, 256, %s2713, %s2698, 128, 128, 8
        $region40: #{tpu_custom_call.1} parent=31 // pred_fallthru
          _
      $region32: #{tpu_custom_call.1} parent=5 // pred_fallthru
        _
      %p2719 = scmp.le.s32.totalorder 2, %s13
      // Predicated region
      $region41: #{tpu_custom_call.1} parent=5 // pred_check
        %p2720 = pneg %p2719
      $region42: #{tpu_custom_call.1} parent=5 // pred_check_branch
        %2722 = sbr.rel (%p2720) target = $region44
      $region43: #{tpu_custom_call.1} parent=5 // pred_region
        %s2723 = ssub.s32 %s13, 2
        // Predicated region
        $region45: #{tpu_custom_call.1} parent=43 // pred_check
          %p2724 = pneg %p115
        $region46: #{tpu_custom_call.1} parent=43 // pred_check_branch
          %2726 = sbr.rel (%p2724) target = $region48
        $region47: #{tpu_custom_call.1} parent=43 // pred_region
          %s2727 = sand.u32 %s100, 1
          %s2728 = scalar_lea.sflag [#allocation4], %s2727
          %s2729 = sand.u32 %s100, 1
          %s2730 = smul.addr %s2729, 16
          %s2731 = scalar_lea.vmem [#allocation5], %s2730
          %2733 = dma.done %s2728, 256
        $region48: #{tpu_custom_call.1} parent=43 // pred_fallthru
          _
      $region44: #{tpu_custom_call.1} parent=5 // pred_fallthru
        _
    $region6: #{tpu_custom_call.1} parent=1 // loop_footer
      %s17 = sadd.s32 1, %s13
    $region7: #{tpu_custom_call.1} parent=1 // loop_footer_branch
      %12 = sbr.rel target = $region3
    $region8: #{tpu_custom_call.1} parent=1 // loop_exit
      _
    %2734 = vsyncpa [#allocation3], 1
    %s2735 = scalar_lea.sflag [#allocation3], 1
    %2736 = vsyncpa %s2735, 1
    %2737 = vsyncpa [#allocation4], 1
    %s2738 = scalar_lea.sflag [#allocation4], 1
    %2739 = vsyncpa %s2738, 1

</llo_original>
